<compile_context>
chip_gen: v6e
topology: v6e:2x2x1
jax: 0.10.0
libtpu: 0.0.40
codegen_flags: <defaults>
</compile_context>

<pallas_src>
import functools

import jax
import jax.numpy as jnp
from jax import lax
from jax.experimental import pallas as pl
from jax.experimental.pallas import tpu as pltpu

EPS = 1e-5


def _rresnet_block_kernel(x_ref, w1_ref, b1_ref, w2_ref, b2_ref, out_ref,
                          *, C, H, W, NB):
  """Fused reflpad->conv1->IN->ReLU->reflpad->conv2->IN->(+x), NB images/step.

  Working layout is (R, HW) with R = NB*C: every row is one (image, channel)
  plane flattened, the lane axis carries the full H*W pixels.
  """
  HW = H * W
  R = NB * C

  # (NB, C, HW) -> (R, HW): free leading-dim merge, no relayout.
  h0 = x_ref[...].reshape(R, HW).astype(jnp.float32)

  # Column index within a row of the image, for the reflection boundary masks.
  xcol = lax.broadcasted_iota(jnp.int32, (1, HW), 1) % W
  is_left = xcol == 0
  is_right = xcol == (W - 1)

  def conv_instancenorm(h, w_all, b):
    """3x3 conv (reflect pad 1) + bias + InstanceNorm2d(affine=False)."""
    # Vertical (row) taps: contiguous lane-slice concats, reflection exact
    # because every row of `h` is exactly one image plane.
    rows = [
        # kh=0 (offset -1): output row y reads row y-1; row 0 reads row 1.
        jnp.concatenate([h[:, W:2 * W], h[:, :HW - W]], axis=1),
        # kh=1 (offset 0).
        h,
        # kh=2 (offset +1): output row y reads row y+1; row H-1 reads row H-2.
        jnp.concatenate([h[:, W:], h[:, HW - 2 * W:HW - W]], axis=1),
    ]

    acc = jnp.zeros((R, HW), jnp.float32)
    for kh in range(3):
      r = rows[kh]
      # Horizontal +/-1 lane shifts; the wrapped / cross-row elements are
      # exactly the reflection-masked positions below.
      left = jnp.concatenate([r[:, :1], r[:, :HW - 1]], axis=1)    # out[p]=r[p-1]
      right = jnp.concatenate([r[:, 1:], r[:, HW - 1:]], axis=1)   # out[p]=r[p+1]
      taps = [
          jnp.where(is_left, right, left),    # kw=0 (offset -1), col 0 -> col 1
          r,                                  # kw=1 (offset 0)
          jnp.where(is_right, left, right),   # kw=2 (offset +1), col W-1 -> W-2
      ]
      for kw in range(3):
        # Block-diagonal (R,R) weight keeps the contraction per-image while the
        # MXU sees a plain 2-D matmul with a full-sublane M dim.
        acc = acc + jnp.dot(w_all[kh * 3 + kw], taps[kw],
                            preferred_element_type=jnp.float32)

    y = acc + b                                          # (R,1) broadcast bias

    # Two-pass instance norm (biased variance, eps inside the sqrt).
    mean = jnp.mean(y, axis=1, keepdims=True)
    d = y - mean
    var = jnp.mean(d * d, axis=1, keepdims=True)
    return d * lax.rsqrt(var + EPS)

  # NOTE: inputs here are f32; for bf16 deployments feed the taps/weights in
  # bf16 and keep preferred_element_type=f32 (v6e/v7x fast MXU path).
  w1 = w1_ref[...].astype(jnp.float32)
  b1 = b1_ref[...].astype(jnp.float32)
  w2 = w2_ref[...].astype(jnp.float32)
  b2 = b2_ref[...].astype(jnp.float32)

  h1 = jnp.maximum(conv_instancenorm(h0, w1, b1), 0.0)
  y2 = conv_instancenorm(h1, w2, b2)

  out_ref[...] = (h0 + y2).reshape(NB, C, HW).astype(out_ref.dtype)


def _pick_images_per_step(N, C, HW, itemsize):
  """Largest divisor of N that keeps the per-step block small (fills sublanes)."""
  for cand in range(min(N, 8), 0, -1):
    if N % cand != 0:
      continue
    if cand * C > 64:                       # bound block-diagonal weight waste
      continue
    if cand * C * HW * itemsize > (2 << 20):  # keep per-step block ~<=2 MiB
      continue
    return cand
  return 1


def rresnet_block_forward(x_nchw, w1, b1, w2, b2, *, images_per_step=None):
  """Pallas implementation of RResnetBlock.forward.

  x_nchw: (N, C, H, W)  PyTorch layout (kept; no transposes).
  w1, w2: (3, 3, C, C)  HWIO conv weights (PyTorch (Co,Ci,3,3).permute(2,3,1,0)).
  b1, b2: (C,)          conv biases.
  """
  N, C, H, W = x_nchw.shape
  assert H >= 2 and W >= 2, "ReflectionPad2d(1) requires H, W >= 2"
  HW = H * W
  dtype = x_nchw.dtype
  itemsize = jnp.dtype(dtype).itemsize

  if images_per_step is None:
    images_per_step = _pick_images_per_step(N, C, HW, itemsize)
  NB = images_per_step
  assert N % NB == 0, "images_per_step must divide the batch"
  R = NB * C

  # Free reshape only (no transpose, no padding) outside the kernel.
  x_flat = x_nchw.reshape(N, C, HW)

  # (kh,kw,ci,co) -> (9, co, ci), then block-diagonal over the NB images of a step.
  def prep_w(w_hwio):
    wmat = jnp.transpose(w_hwio, (0, 1, 3, 2)).reshape(9, C, C)
    eye = jnp.eye(NB, dtype=wmat.dtype)
    return jnp.einsum("nm,kab->knamb", eye, wmat).reshape(9, R, R)

  def prep_b(b):
    return jnp.tile(b.reshape(1, C), (NB, 1)).reshape(R, 1)

  w1b, w2b = prep_w(w1), prep_w(w2)
  b1b, b2b = prep_b(b1), prep_b(b2)

  w_itemsize = jnp.dtype(w1b.dtype).itemsize
  b_itemsize = jnp.dtype(b1b.dtype).itemsize
  cost = pl.CostEstimate(
      flops=2 * (2 * 9 * N * HW * C * R),     # 2 convs x 9 taps x (R,R)@(R,HW)
      transcendentals=2 * N * C,              # one rsqrt per (image, channel, conv)
      bytes_accessed=2 * x_flat.size * itemsize
      + (w1b.size + w2b.size) * w_itemsize
      + (b1b.size + b2b.size) * b_itemsize,
  )

  out = pl.pallas_call(
      functools.partial(_rresnet_block_kernel, C=C, H=H, W=W, NB=NB),
      out_shape=jax.ShapeDtypeStruct((N, C, HW), dtype),
      grid_spec=pltpu.PrefetchScalarGridSpec(
          num_scalar_prefetch=0,
          grid=(N // NB,),
          in_specs=[
              pl.BlockSpec((NB, C, HW), lambda i: (i, 0, 0)),
              pl.BlockSpec((9, R, R), lambda i: (0, 0, 0)),
              pl.BlockSpec((R, 1), lambda i: (0, 0)),
              pl.BlockSpec((9, R, R), lambda i: (0, 0, 0)),
              pl.BlockSpec((R, 1), lambda i: (0, 0)),
          ],
          out_specs=pl.BlockSpec((NB, C, HW), lambda i: (i, 0, 0)),
      ),
      compiler_params=pltpu.CompilerParams(
          dimension_semantics=("parallel",),
          vmem_limit_bytes=32 * 1024 * 1024,
      ),
      cost_estimate=cost,
  )(x_flat, w1b, b1b, w2b, b2b)

  return out.reshape(N, C, H, W)


def rresnet_block_reference(x_nchw, w1, b1, w2, b2):
  """Pure-JAX reference for correctness checking."""
  x = jnp.transpose(x_nchw, (0, 2, 3, 1))

  def conv(inp, w, b):
    xp = jnp.pad(inp, ((0, 0), (1, 1), (1, 1), (0, 0)), mode="reflect")
    y = lax.conv_general_dilated(
        xp, w, window_strides=(1, 1), padding="VALID",
        dimension_numbers=("NHWC", "HWIO", "NHWC"))
    return y + b[None, None, None, :]

  def inorm(y):
    m = jnp.mean(y, axis=(1, 2), keepdims=True)
    v = jnp.mean((y - m) ** 2, axis=(1, 2), keepdims=True)
    return (y - m) / jnp.sqrt(v + EPS)

  h = jnp.maximum(inorm(conv(x, w1, b1)), 0.0)
  h = inorm(conv(h, w2, b2))
  out = x + h
  return jnp.transpose(out, (0, 3, 1, 2))


if __name__ == "__main__":
  # Small shapes consistent with the module: dim=4 channels, 16x16 spatial.
  N, C, H, W = 2, 4, 16, 16

  key = jax.random.PRNGKey(0)
  kx, kw1, kb1, kw2, kb2 = jax.random.split(key, 5)

  x = jax.random.normal(kx, (N, C, H, W), dtype=jnp.float32)
  # Synthetic conv params (HWIO weights, (C,) biases).
  w1 = jax.random.normal(kw1, (3, 3, C, C), dtype=jnp.float32) * 0.2
  b1 = jax.random.normal(kb1, (C,), dtype=jnp.float32) * 0.1
  w2 = jax.random.normal(kw2, (3, 3, C, C), dtype=jnp.float32) * 0.2
  b2 = jax.random.normal(kb2, (C,), dtype=jnp.float32) * 0.1

  out = rresnet_block_forward(x, w1, b1, w2, b2)
  out = jax.block_until_ready(out)

  ref = jax.block_until_ready(rresnet_block_reference(x, w1, b1, w2, b2))
  assert out.shape == (N, C, H, W)
  max_err = float(jnp.max(jnp.abs(out - ref)))
  assert max_err < 1e-4, f"mismatch vs reference: {max_err}"

  print("KERNEL_OK")
</pallas_src>

<mosaic_0001>
module attributes {stable_mosaic.version = 11 : i64} {
  func.func @_rresnet_block_kernel(%arg0: i32, %arg1: memref<2x4x256xf32, #tpu.memory_space<vmem>>, %arg2: memref<9x8x8xf32, #tpu.memory_space<vmem>>, %arg3: memref<8x1xf32, #tpu.memory_space<vmem>>, %arg4: memref<9x8x8xf32, #tpu.memory_space<vmem>>, %arg5: memref<8x1xf32, #tpu.memory_space<vmem>>, %arg6: memref<2x4x256xf32, #tpu.memory_space<vmem>>) attributes {dimension_semantics = [#tpu.dimension_semantics<parallel>], iteration_bounds = array<i64: 1>, scalar_prefetch = 0 : i64, scratch_operands = 0 : i64, tpu.core_type = #tpu.core_type<tc>, window_params = [{transform_indices = @transform_0, window_bounds = array<i64: 2, 4, 256>}, {pipeline_mode = #tpu.pipeline_mode<synchronous>, transform_indices = @transform_1, window_bounds = array<i64: 9, 8, 8>}, {pipeline_mode = #tpu.pipeline_mode<synchronous>, transform_indices = @transform_2, window_bounds = array<i64: 8, 1>}, {pipeline_mode = #tpu.pipeline_mode<synchronous>, transform_indices = @transform_3, window_bounds = array<i64: 9, 8, 8>}, {pipeline_mode = #tpu.pipeline_mode<synchronous>, transform_indices = @transform_4, window_bounds = array<i64: 8, 1>}, {transform_indices = @transform_5, window_bounds = array<i64: 2, 4, 256>}]} {
    %c0 = arith.constant 0 : index
    %c0_0 = arith.constant 0 : index
    %c0_1 = arith.constant 0 : index
    %0 = vector.load %arg1[%c0, %c0_0, %c0_1] : memref<2x4x256xf32, #tpu.memory_space<vmem>>, vector<2x4x256xf32>
    %1 = vector.shape_cast %0 : vector<2x4x256xf32> to vector<8x256xf32>
    %2 = tpu.iota {dimensions = array<i32: 1>} : vector<1x256xi32>
    %c16_i32 = arith.constant 16 : i32
    %c0_i32 = arith.constant 0 : i32
    %3 = arith.cmpi eq, %c16_i32, %c0_i32 : i32
    %c1_i32 = arith.constant 1 : i32
    %4 = arith.select %3, %c1_i32, %c16_i32 : i32
    %5 = vector.broadcast %4 : i32 to vector<1x256xi32>
    %6 = arith.remsi %2, %5 : vector<1x256xi32>
    %c0_i32_2 = arith.constant 0 : i32
    %7 = vector.broadcast %c0_i32_2 : i32 to vector<1x256xi32>
    %8 = arith.cmpi ne, %6, %7 : vector<1x256xi32>
    %c0_i32_3 = arith.constant 0 : i32
    %9 = vector.broadcast %c0_i32_3 : i32 to vector<1x256xi32>
    %10 = arith.cmpi slt, %6, %9 : vector<1x256xi32>
    %c0_i32_4 = arith.constant 0 : i32
    %11 = arith.cmpi slt, %4, %c0_i32_4 : i32
    %12 = vector.broadcast %11 : i1 to vector<1x256xi1>
    %13 = vector.broadcast %12 : vector<1x256xi1> to vector<1x256xi1>
    %14 = arith.xori %10, %13 : vector<1x256xi1>
    %15 = arith.andi %14, %8 : vector<1x256xi1>
    %16 = vector.broadcast %4 : i32 to vector<1x256xi32>
    %17 = arith.addi %6, %16 : vector<1x256xi32>
    %18 = arith.select %15, %17, %6 : vector<1x256xi1>, vector<1x256xi32>
    %c0_i32_5 = arith.constant 0 : i32
    %19 = vector.broadcast %c0_i32_5 : i32 to vector<1x256xi32>
    %20 = arith.cmpi eq, %18, %19 : vector<1x256xi32>
    %c15_i32 = arith.constant 15 : i32
    %21 = vector.broadcast %c15_i32 : i32 to vector<1x256xi32>
    %22 = arith.cmpi eq, %18, %21 : vector<1x256xi32>
    %c0_6 = arith.constant 0 : index
    %c0_7 = arith.constant 0 : index
    %c0_8 = arith.constant 0 : index
    %23 = vector.load %arg2[%c0_6, %c0_7, %c0_8] : memref<9x8x8xf32, #tpu.memory_space<vmem>>, vector<9x8x8xf32>
    %c0_9 = arith.constant 0 : index
    %c0_10 = arith.constant 0 : index
    %24 = vector.load %arg3[%c0_9, %c0_10] : memref<8x1xf32, #tpu.memory_space<vmem>>, vector<8x1xf32>
    %c0_11 = arith.constant 0 : index
    %c0_12 = arith.constant 0 : index
    %c0_13 = arith.constant 0 : index
    %25 = vector.load %arg4[%c0_11, %c0_12, %c0_13] : memref<9x8x8xf32, #tpu.memory_space<vmem>>, vector<9x8x8xf32>
    %c0_14 = arith.constant 0 : index
    %c0_15 = arith.constant 0 : index
    %26 = vector.load %arg5[%c0_14, %c0_15] : memref<8x1xf32, #tpu.memory_space<vmem>>, vector<8x1xf32>
    %27 = vector.extract_strided_slice %1 {offsets = [0, 16], sizes = [8, 16], strides = [1, 1]} : vector<8x256xf32> to vector<8x16xf32>
    %28 = vector.extract_strided_slice %1 {offsets = [0, 0], sizes = [8, 240], strides = [1, 1]} : vector<8x256xf32> to vector<8x240xf32>
    %29 = tpu.concatenate %27, %28 in 1 : vector<8x16xf32>, vector<8x240xf32> -> vector<8x256xf32>
    %30 = vector.extract_strided_slice %1 {offsets = [0, 16], sizes = [8, 240], strides = [1, 1]} : vector<8x256xf32> to vector<8x240xf32>
    %31 = vector.extract_strided_slice %1 {offsets = [0, 224], sizes = [8, 16], strides = [1, 1]} : vector<8x256xf32> to vector<8x16xf32>
    %32 = tpu.concatenate %30, %31 in 1 : vector<8x240xf32>, vector<8x16xf32> -> vector<8x256xf32>
    %cst = arith.constant 0.000000e+00 : f32
    %33 = vector.broadcast %cst : f32 to vector<8x256xf32>
    %34 = vector.extract_strided_slice %29 {offsets = [0, 0], sizes = [8, 1], strides = [1, 1]} : vector<8x256xf32> to vector<8x1xf32>
    %35 = vector.extract_strided_slice %29 {offsets = [0, 0], sizes = [8, 255], strides = [1, 1]} : vector<8x256xf32> to vector<8x255xf32>
    %36 = tpu.concatenate %34, %35 in 1 : vector<8x1xf32>, vector<8x255xf32> -> vector<8x256xf32>
    %37 = vector.extract_strided_slice %29 {offsets = [0, 1], sizes = [8, 255], strides = [1, 1]} : vector<8x256xf32> to vector<8x255xf32>
    %38 = vector.extract_strided_slice %29 {offsets = [0, 255], sizes = [8, 1], strides = [1, 1]} : vector<8x256xf32> to vector<8x1xf32>
    %39 = tpu.concatenate %37, %38 in 1 : vector<8x255xf32>, vector<8x1xf32> -> vector<8x256xf32>
    %40 = vector.shape_cast %20 : vector<1x256xi1> to vector<1x256xi1>
    %41 = vector.broadcast %40 : vector<1x256xi1> to vector<8x256xi1>
    %42 = arith.select %41, %39, %36 : vector<8x256xi1>, vector<8x256xf32>
    %43 = vector.shape_cast %22 : vector<1x256xi1> to vector<1x256xi1>
    %44 = vector.broadcast %43 : vector<1x256xi1> to vector<8x256xi1>
    %45 = arith.select %44, %36, %39 : vector<8x256xi1>, vector<8x256xf32>
    %46 = vector.extract_strided_slice %23 {offsets = [0, 0, 0], sizes = [1, 8, 8], strides = [1, 1, 1]} : vector<9x8x8xf32> to vector<1x8x8xf32>
    %47 = vector.shape_cast %46 : vector<1x8x8xf32> to vector<8x8xf32>
    %cst_16 = arith.constant dense<0.000000e+00> : vector<8x256xf32>
    %48 = tpu.matmul %47, %42, %cst_16 {dimension_numbers = #tpu.dot_dimension_numbers<[1], [0], [0], [1], [0, 0, 1, 1], [], []>} : vector<8x8xf32>, vector<8x256xf32>, vector<8x256xf32> -> vector<8x256xf32>
    %49 = arith.addf %33, %48 : vector<8x256xf32>
    %50 = vector.extract_strided_slice %23 {offsets = [1, 0, 0], sizes = [1, 8, 8], strides = [1, 1, 1]} : vector<9x8x8xf32> to vector<1x8x8xf32>
    %51 = vector.shape_cast %50 : vector<1x8x8xf32> to vector<8x8xf32>
    %cst_17 = arith.constant dense<0.000000e+00> : vector<8x256xf32>
    %52 = tpu.matmul %51, %29, %cst_17 {dimension_numbers = #tpu.dot_dimension_numbers<[1], [0], [0], [1], [0, 0, 1, 1], [], []>} : vector<8x8xf32>, vector<8x256xf32>, vector<8x256xf32> -> vector<8x256xf32>
    %53 = arith.addf %49, %52 : vector<8x256xf32>
    %54 = vector.extract_strided_slice %23 {offsets = [2, 0, 0], sizes = [1, 8, 8], strides = [1, 1, 1]} : vector<9x8x8xf32> to vector<1x8x8xf32>
    %55 = vector.shape_cast %54 : vector<1x8x8xf32> to vector<8x8xf32>
    %cst_18 = arith.constant dense<0.000000e+00> : vector<8x256xf32>
    %56 = tpu.matmul %55, %45, %cst_18 {dimension_numbers = #tpu.dot_dimension_numbers<[1], [0], [0], [1], [0, 0, 1, 1], [], []>} : vector<8x8xf32>, vector<8x256xf32>, vector<8x256xf32> -> vector<8x256xf32>
    %57 = arith.addf %53, %56 : vector<8x256xf32>
    %58 = vector.extract_strided_slice %1 {offsets = [0, 0], sizes = [8, 1], strides = [1, 1]} : vector<8x256xf32> to vector<8x1xf32>
    %59 = vector.extract_strided_slice %1 {offsets = [0, 0], sizes = [8, 255], strides = [1, 1]} : vector<8x256xf32> to vector<8x255xf32>
    %60 = tpu.concatenate %58, %59 in 1 : vector<8x1xf32>, vector<8x255xf32> -> vector<8x256xf32>
    %61 = vector.extract_strided_slice %1 {offsets = [0, 1], sizes = [8, 255], strides = [1, 1]} : vector<8x256xf32> to vector<8x255xf32>
    %62 = vector.extract_strided_slice %1 {offsets = [0, 255], sizes = [8, 1], strides = [1, 1]} : vector<8x256xf32> to vector<8x1xf32>
    %63 = tpu.concatenate %61, %62 in 1 : vector<8x255xf32>, vector<8x1xf32> -> vector<8x256xf32>
    %64 = vector.shape_cast %20 : vector<1x256xi1> to vector<1x256xi1>
    %65 = vector.broadcast %64 : vector<1x256xi1> to vector<8x256xi1>
    %66 = arith.select %65, %63, %60 : vector<8x256xi1>, vector<8x256xf32>
    %67 = vector.shape_cast %22 : vector<1x256xi1> to vector<1x256xi1>
    %68 = vector.broadcast %67 : vector<1x256xi1> to vector<8x256xi1>
    %69 = arith.select %68, %60, %63 : vector<8x256xi1>, vector<8x256xf32>
    %70 = vector.extract_strided_slice %23 {offsets = [3, 0, 0], sizes = [1, 8, 8], strides = [1, 1, 1]} : vector<9x8x8xf32> to vector<1x8x8xf32>
    %71 = vector.shape_cast %70 : vector<1x8x8xf32> to vector<8x8xf32>
    %cst_19 = arith.constant dense<0.000000e+00> : vector<8x256xf32>
    %72 = tpu.matmul %71, %66, %cst_19 {dimension_numbers = #tpu.dot_dimension_numbers<[1], [0], [0], [1], [0, 0, 1, 1], [], []>} : vector<8x8xf32>, vector<8x256xf32>, vector<8x256xf32> -> vector<8x256xf32>
    %73 = arith.addf %57, %72 : vector<8x256xf32>
    %74 = vector.extract_strided_slice %23 {offsets = [4, 0, 0], sizes = [1, 8, 8], strides = [1, 1, 1]} : vector<9x8x8xf32> to vector<1x8x8xf32>
    %75 = vector.shape_cast %74 : vector<1x8x8xf32> to vector<8x8xf32>
    %cst_20 = arith.constant dense<0.000000e+00> : vector<8x256xf32>
    %76 = tpu.matmul %75, %1, %cst_20 {dimension_numbers = #tpu.dot_dimension_numbers<[1], [0], [0], [1], [0, 0, 1, 1], [], []>} : vector<8x8xf32>, vector<8x256xf32>, vector<8x256xf32> -> vector<8x256xf32>
    %77 = arith.addf %73, %76 : vector<8x256xf32>
    %78 = vector.extract_strided_slice %23 {offsets = [5, 0, 0], sizes = [1, 8, 8], strides = [1, 1, 1]} : vector<9x8x8xf32> to vector<1x8x8xf32>
    %79 = vector.shape_cast %78 : vector<1x8x8xf32> to vector<8x8xf32>
    %cst_21 = arith.constant dense<0.000000e+00> : vector<8x256xf32>
    %80 = tpu.matmul %79, %69, %cst_21 {dimension_numbers = #tpu.dot_dimension_numbers<[1], [0], [0], [1], [0, 0, 1, 1], [], []>} : vector<8x8xf32>, vector<8x256xf32>, vector<8x256xf32> -> vector<8x256xf32>
    %81 = arith.addf %77, %80 : vector<8x256xf32>
    %82 = vector.extract_strided_slice %32 {offsets = [0, 0], sizes = [8, 1], strides = [1, 1]} : vector<8x256xf32> to vector<8x1xf32>
    %83 = vector.extract_strided_slice %32 {offsets = [0, 0], sizes = [8, 255], strides = [1, 1]} : vector<8x256xf32> to vector<8x255xf32>
    %84 = tpu.concatenate %82, %83 in 1 : vector<8x1xf32>, vector<8x255xf32> -> vector<8x256xf32>
    %85 = vector.extract_strided_slice %32 {offsets = [0, 1], sizes = [8, 255], strides = [1, 1]} : vector<8x256xf32> to vector<8x255xf32>
    %86 = vector.extract_strided_slice %32 {offsets = [0, 255], sizes = [8, 1], strides = [1, 1]} : vector<8x256xf32> to vector<8x1xf32>
    %87 = tpu.concatenate %85, %86 in 1 : vector<8x255xf32>, vector<8x1xf32> -> vector<8x256xf32>
    %88 = vector.shape_cast %20 : vector<1x256xi1> to vector<1x256xi1>
    %89 = vector.broadcast %88 : vector<1x256xi1> to vector<8x256xi1>
    %90 = arith.select %89, %87, %84 : vector<8x256xi1>, vector<8x256xf32>
    %91 = vector.shape_cast %22 : vector<1x256xi1> to vector<1x256xi1>
    %92 = vector.broadcast %91 : vector<1x256xi1> to vector<8x256xi1>
    %93 = arith.select %92, %84, %87 : vector<8x256xi1>, vector<8x256xf32>
    %94 = vector.extract_strided_slice %23 {offsets = [6, 0, 0], sizes = [1, 8, 8], strides = [1, 1, 1]} : vector<9x8x8xf32> to vector<1x8x8xf32>
    %95 = vector.shape_cast %94 : vector<1x8x8xf32> to vector<8x8xf32>
    %cst_22 = arith.constant dense<0.000000e+00> : vector<8x256xf32>
    %96 = tpu.matmul %95, %90, %cst_22 {dimension_numbers = #tpu.dot_dimension_numbers<[1], [0], [0], [1], [0, 0, 1, 1], [], []>} : vector<8x8xf32>, vector<8x256xf32>, vector<8x256xf32> -> vector<8x256xf32>
    %97 = arith.addf %81, %96 : vector<8x256xf32>
    %98 = vector.extract_strided_slice %23 {offsets = [7, 0, 0], sizes = [1, 8, 8], strides = [1, 1, 1]} : vector<9x8x8xf32> to vector<1x8x8xf32>
    %99 = vector.shape_cast %98 : vector<1x8x8xf32> to vector<8x8xf32>
    %cst_23 = arith.constant dense<0.000000e+00> : vector<8x256xf32>
    %100 = tpu.matmul %99, %32, %cst_23 {dimension_numbers = #tpu.dot_dimension_numbers<[1], [0], [0], [1], [0, 0, 1, 1], [], []>} : vector<8x8xf32>, vector<8x256xf32>, vector<8x256xf32> -> vector<8x256xf32>
    %101 = arith.addf %97, %100 : vector<8x256xf32>
    %102 = vector.extract_strided_slice %23 {offsets = [8, 0, 0], sizes = [1, 8, 8], strides = [1, 1, 1]} : vector<9x8x8xf32> to vector<1x8x8xf32>
    %103 = vector.shape_cast %102 : vector<1x8x8xf32> to vector<8x8xf32>
    %cst_24 = arith.constant dense<0.000000e+00> : vector<8x256xf32>
    %104 = tpu.matmul %103, %93, %cst_24 {dimension_numbers = #tpu.dot_dimension_numbers<[1], [0], [0], [1], [0, 0, 1, 1], [], []>} : vector<8x8xf32>, vector<8x256xf32>, vector<8x256xf32> -> vector<8x256xf32>
    %105 = arith.addf %101, %104 : vector<8x256xf32>
    %106 = vector.broadcast %24 : vector<8x1xf32> to vector<8x256xf32>
    %107 = arith.addf %105, %106 : vector<8x256xf32>
    %cst_25 = arith.constant dense<0.000000e+00> : vector<8xf32>
    %108 = vector.multi_reduction <add>, %107, %cst_25 [1] : vector<8x256xf32> to vector<8xf32>
    %109 = vector.shape_cast %108 : vector<8xf32> to vector<8x1xf32>
    %cst_26 = arith.constant 2.560000e+02 : f32
    %110 = vector.broadcast %cst_26 : f32 to vector<8x1xf32>
    %111 = arith.divf %109, %110 : vector<8x1xf32>
    %112 = vector.broadcast %111 : vector<8x1xf32> to vector<8x256xf32>
    %113 = arith.subf %107, %112 : vector<8x256xf32>
    %114 = arith.mulf %113, %113 : vector<8x256xf32>
    %cst_27 = arith.constant dense<0.000000e+00> : vector<8xf32>
    %115 = vector.multi_reduction <add>, %114, %cst_27 [1] : vector<8x256xf32> to vector<8xf32>
    %116 = vector.shape_cast %115 : vector<8xf32> to vector<8x1xf32>
    %cst_28 = arith.constant 2.560000e+02 : f32
    %117 = vector.broadcast %cst_28 : f32 to vector<8x1xf32>
    %118 = arith.divf %116, %117 : vector<8x1xf32>
    %cst_29 = arith.constant 9.99999974E-6 : f32
    %119 = vector.broadcast %cst_29 : f32 to vector<8x1xf32>
    %120 = arith.addf %118, %119 : vector<8x1xf32>
    %121 = math.rsqrt %120 : vector<8x1xf32>
    %122 = vector.broadcast %121 : vector<8x1xf32> to vector<8x256xf32>
    %123 = arith.mulf %113, %122 : vector<8x256xf32>
    %cst_30 = arith.constant 0.000000e+00 : f32
    %124 = vector.broadcast %cst_30 : f32 to vector<8x256xf32>
    %125 = arith.maximumf %123, %124 : vector<8x256xf32>
    %126 = vector.extract_strided_slice %125 {offsets = [0, 16], sizes = [8, 16], strides = [1, 1]} : vector<8x256xf32> to vector<8x16xf32>
    %127 = vector.extract_strided_slice %125 {offsets = [0, 0], sizes = [8, 240], strides = [1, 1]} : vector<8x256xf32> to vector<8x240xf32>
    %128 = tpu.concatenate %126, %127 in 1 : vector<8x16xf32>, vector<8x240xf32> -> vector<8x256xf32>
    %129 = vector.extract_strided_slice %125 {offsets = [0, 16], sizes = [8, 240], strides = [1, 1]} : vector<8x256xf32> to vector<8x240xf32>
    %130 = vector.extract_strided_slice %125 {offsets = [0, 224], sizes = [8, 16], strides = [1, 1]} : vector<8x256xf32> to vector<8x16xf32>
    %131 = tpu.concatenate %129, %130 in 1 : vector<8x240xf32>, vector<8x16xf32> -> vector<8x256xf32>
    %cst_31 = arith.constant 0.000000e+00 : f32
    %132 = vector.broadcast %cst_31 : f32 to vector<8x256xf32>
    %133 = vector.extract_strided_slice %128 {offsets = [0, 0], sizes = [8, 1], strides = [1, 1]} : vector<8x256xf32> to vector<8x1xf32>
    %134 = vector.extract_strided_slice %128 {offsets = [0, 0], sizes = [8, 255], strides = [1, 1]} : vector<8x256xf32> to vector<8x255xf32>
    %135 = tpu.concatenate %133, %134 in 1 : vector<8x1xf32>, vector<8x255xf32> -> vector<8x256xf32>
    %136 = vector.extract_strided_slice %128 {offsets = [0, 1], sizes = [8, 255], strides = [1, 1]} : vector<8x256xf32> to vector<8x255xf32>
    %137 = vector.extract_strided_slice %128 {offsets = [0, 255], sizes = [8, 1], strides = [1, 1]} : vector<8x256xf32> to vector<8x1xf32>
    %138 = tpu.concatenate %136, %137 in 1 : vector<8x255xf32>, vector<8x1xf32> -> vector<8x256xf32>
    %139 = vector.shape_cast %20 : vector<1x256xi1> to vector<1x256xi1>
    %140 = vector.broadcast %139 : vector<1x256xi1> to vector<8x256xi1>
    %141 = arith.select %140, %138, %135 : vector<8x256xi1>, vector<8x256xf32>
    %142 = vector.shape_cast %22 : vector<1x256xi1> to vector<1x256xi1>
    %143 = vector.broadcast %142 : vector<1x256xi1> to vector<8x256xi1>
    %144 = arith.select %143, %135, %138 : vector<8x256xi1>, vector<8x256xf32>
    %145 = vector.extract_strided_slice %25 {offsets = [0, 0, 0], sizes = [1, 8, 8], strides = [1, 1, 1]} : vector<9x8x8xf32> to vector<1x8x8xf32>
    %146 = vector.shape_cast %145 : vector<1x8x8xf32> to vector<8x8xf32>
    %cst_32 = arith.constant dense<0.000000e+00> : vector<8x256xf32>
    %147 = tpu.matmul %146, %141, %cst_32 {dimension_numbers = #tpu.dot_dimension_numbers<[1], [0], [0], [1], [0, 0, 1, 1], [], []>} : vector<8x8xf32>, vector<8x256xf32>, vector<8x256xf32> -> vector<8x256xf32>
    %148 = arith.addf %132, %147 : vector<8x256xf32>
    %149 = vector.extract_strided_slice %25 {offsets = [1, 0, 0], sizes = [1, 8, 8], strides = [1, 1, 1]} : vector<9x8x8xf32> to vector<1x8x8xf32>
    %150 = vector.shape_cast %149 : vector<1x8x8xf32> to vector<8x8xf32>
    %cst_33 = arith.constant dense<0.000000e+00> : vector<8x256xf32>
    %151 = tpu.matmul %150, %128, %cst_33 {dimension_numbers = #tpu.dot_dimension_numbers<[1], [0], [0], [1], [0, 0, 1, 1], [], []>} : vector<8x8xf32>, vector<8x256xf32>, vector<8x256xf32> -> vector<8x256xf32>
    %152 = arith.addf %148, %151 : vector<8x256xf32>
    %153 = vector.extract_strided_slice %25 {offsets = [2, 0, 0], sizes = [1, 8, 8], strides = [1, 1, 1]} : vector<9x8x8xf32> to vector<1x8x8xf32>
    %154 = vector.shape_cast %153 : vector<1x8x8xf32> to vector<8x8xf32>
    %cst_34 = arith.constant dense<0.000000e+00> : vector<8x256xf32>
    %155 = tpu.matmul %154, %144, %cst_34 {dimension_numbers = #tpu.dot_dimension_numbers<[1], [0], [0], [1], [0, 0, 1, 1], [], []>} : vector<8x8xf32>, vector<8x256xf32>, vector<8x256xf32> -> vector<8x256xf32>
    %156 = arith.addf %152, %155 : vector<8x256xf32>
    %157 = vector.extract_strided_slice %125 {offsets = [0, 0], sizes = [8, 1], strides = [1, 1]} : vector<8x256xf32> to vector<8x1xf32>
    %158 = vector.extract_strided_slice %125 {offsets = [0, 0], sizes = [8, 255], strides = [1, 1]} : vector<8x256xf32> to vector<8x255xf32>
    %159 = tpu.concatenate %157, %158 in 1 : vector<8x1xf32>, vector<8x255xf32> -> vector<8x256xf32>
    %160 = vector.extract_strided_slice %125 {offsets = [0, 1], sizes = [8, 255], strides = [1, 1]} : vector<8x256xf32> to vector<8x255xf32>
    %161 = vector.extract_strided_slice %125 {offsets = [0, 255], sizes = [8, 1], strides = [1, 1]} : vector<8x256xf32> to vector<8x1xf32>
    %162 = tpu.concatenate %160, %161 in 1 : vector<8x255xf32>, vector<8x1xf32> -> vector<8x256xf32>
    %163 = vector.shape_cast %20 : vector<1x256xi1> to vector<1x256xi1>
    %164 = vector.broadcast %163 : vector<1x256xi1> to vector<8x256xi1>
    %165 = arith.select %164, %162, %159 : vector<8x256xi1>, vector<8x256xf32>
    %166 = vector.shape_cast %22 : vector<1x256xi1> to vector<1x256xi1>
    %167 = vector.broadcast %166 : vector<1x256xi1> to vector<8x256xi1>
    %168 = arith.select %167, %159, %162 : vector<8x256xi1>, vector<8x256xf32>
    %169 = vector.extract_strided_slice %25 {offsets = [3, 0, 0], sizes = [1, 8, 8], strides = [1, 1, 1]} : vector<9x8x8xf32> to vector<1x8x8xf32>
    %170 = vector.shape_cast %169 : vector<1x8x8xf32> to vector<8x8xf32>
    %cst_35 = arith.constant dense<0.000000e+00> : vector<8x256xf32>
    %171 = tpu.matmul %170, %165, %cst_35 {dimension_numbers = #tpu.dot_dimension_numbers<[1], [0], [0], [1], [0, 0, 1, 1], [], []>} : vector<8x8xf32>, vector<8x256xf32>, vector<8x256xf32> -> vector<8x256xf32>
    %172 = arith.addf %156, %171 : vector<8x256xf32>
    %173 = vector.extract_strided_slice %25 {offsets = [4, 0, 0], sizes = [1, 8, 8], strides = [1, 1, 1]} : vector<9x8x8xf32> to vector<1x8x8xf32>
    %174 = vector.shape_cast %173 : vector<1x8x8xf32> to vector<8x8xf32>
    %cst_36 = arith.constant dense<0.000000e+00> : vector<8x256xf32>
    %175 = tpu.matmul %174, %125, %cst_36 {dimension_numbers = #tpu.dot_dimension_numbers<[1], [0], [0], [1], [0, 0, 1, 1], [], []>} : vector<8x8xf32>, vector<8x256xf32>, vector<8x256xf32> -> vector<8x256xf32>
    %176 = arith.addf %172, %175 : vector<8x256xf32>
    %177 = vector.extract_strided_slice %25 {offsets = [5, 0, 0], sizes = [1, 8, 8], strides = [1, 1, 1]} : vector<9x8x8xf32> to vector<1x8x8xf32>
    %178 = vector.shape_cast %177 : vector<1x8x8xf32> to vector<8x8xf32>
    %cst_37 = arith.constant dense<0.000000e+00> : vector<8x256xf32>
    %179 = tpu.matmul %178, %168, %cst_37 {dimension_numbers = #tpu.dot_dimension_numbers<[1], [0], [0], [1], [0, 0, 1, 1], [], []>} : vector<8x8xf32>, vector<8x256xf32>, vector<8x256xf32> -> vector<8x256xf32>
    %180 = arith.addf %176, %179 : vector<8x256xf32>
    %181 = vector.extract_strided_slice %131 {offsets = [0, 0], sizes = [8, 1], strides = [1, 1]} : vector<8x256xf32> to vector<8x1xf32>
    %182 = vector.extract_strided_slice %131 {offsets = [0, 0], sizes = [8, 255], strides = [1, 1]} : vector<8x256xf32> to vector<8x255xf32>
    %183 = tpu.concatenate %181, %182 in 1 : vector<8x1xf32>, vector<8x255xf32> -> vector<8x256xf32>
    %184 = vector.extract_strided_slice %131 {offsets = [0, 1], sizes = [8, 255], strides = [1, 1]} : vector<8x256xf32> to vector<8x255xf32>
    %185 = vector.extract_strided_slice %131 {offsets = [0, 255], sizes = [8, 1], strides = [1, 1]} : vector<8x256xf32> to vector<8x1xf32>
    %186 = tpu.concatenate %184, %185 in 1 : vector<8x255xf32>, vector<8x1xf32> -> vector<8x256xf32>
    %187 = vector.shape_cast %20 : vector<1x256xi1> to vector<1x256xi1>
    %188 = vector.broadcast %187 : vector<1x256xi1> to vector<8x256xi1>
    %189 = arith.select %188, %186, %183 : vector<8x256xi1>, vector<8x256xf32>
    %190 = vector.shape_cast %22 : vector<1x256xi1> to vector<1x256xi1>
    %191 = vector.broadcast %190 : vector<1x256xi1> to vector<8x256xi1>
    %192 = arith.select %191, %183, %186 : vector<8x256xi1>, vector<8x256xf32>
    %193 = vector.extract_strided_slice %25 {offsets = [6, 0, 0], sizes = [1, 8, 8], strides = [1, 1, 1]} : vector<9x8x8xf32> to vector<1x8x8xf32>
    %194 = vector.shape_cast %193 : vector<1x8x8xf32> to vector<8x8xf32>
    %cst_38 = arith.constant dense<0.000000e+00> : vector<8x256xf32>
    %195 = tpu.matmul %194, %189, %cst_38 {dimension_numbers = #tpu.dot_dimension_numbers<[1], [0], [0], [1], [0, 0, 1, 1], [], []>} : vector<8x8xf32>, vector<8x256xf32>, vector<8x256xf32> -> vector<8x256xf32>
    %196 = arith.addf %180, %195 : vector<8x256xf32>
    %197 = vector.extract_strided_slice %25 {offsets = [7, 0, 0], sizes = [1, 8, 8], strides = [1, 1, 1]} : vector<9x8x8xf32> to vector<1x8x8xf32>
    %198 = vector.shape_cast %197 : vector<1x8x8xf32> to vector<8x8xf32>
    %cst_39 = arith.constant dense<0.000000e+00> : vector<8x256xf32>
    %199 = tpu.matmul %198, %131, %cst_39 {dimension_numbers = #tpu.dot_dimension_numbers<[1], [0], [0], [1], [0, 0, 1, 1], [], []>} : vector<8x8xf32>, vector<8x256xf32>, vector<8x256xf32> -> vector<8x256xf32>
    %200 = arith.addf %196, %199 : vector<8x256xf32>
    %201 = vector.extract_strided_slice %25 {offsets = [8, 0, 0], sizes = [1, 8, 8], strides = [1, 1, 1]} : vector<9x8x8xf32> to vector<1x8x8xf32>
    %202 = vector.shape_cast %201 : vector<1x8x8xf32> to vector<8x8xf32>
    %cst_40 = arith.constant dense<0.000000e+00> : vector<8x256xf32>
    %203 = tpu.matmul %202, %192, %cst_40 {dimension_numbers = #tpu.dot_dimension_numbers<[1], [0], [0], [1], [0, 0, 1, 1], [], []>} : vector<8x8xf32>, vector<8x256xf32>, vector<8x256xf32> -> vector<8x256xf32>
    %204 = arith.addf %200, %203 : vector<8x256xf32>
    %205 = vector.broadcast %26 : vector<8x1xf32> to vector<8x256xf32>
    %206 = arith.addf %204, %205 : vector<8x256xf32>
    %cst_41 = arith.constant dense<0.000000e+00> : vector<8xf32>
    %207 = vector.multi_reduction <add>, %206, %cst_41 [1] : vector<8x256xf32> to vector<8xf32>
    %208 = vector.shape_cast %207 : vector<8xf32> to vector<8x1xf32>
    %cst_42 = arith.constant 2.560000e+02 : f32
    %209 = vector.broadcast %cst_42 : f32 to vector<8x1xf32>
    %210 = arith.divf %208, %209 : vector<8x1xf32>
    %211 = vector.broadcast %210 : vector<8x1xf32> to vector<8x256xf32>
    %212 = arith.subf %206, %211 : vector<8x256xf32>
    %213 = arith.mulf %212, %212 : vector<8x256xf32>
    %cst_43 = arith.constant dense<0.000000e+00> : vector<8xf32>
    %214 = vector.multi_reduction <add>, %213, %cst_43 [1] : vector<8x256xf32> to vector<8xf32>
    %215 = vector.shape_cast %214 : vector<8xf32> to vector<8x1xf32>
    %cst_44 = arith.constant 2.560000e+02 : f32
    %216 = vector.broadcast %cst_44 : f32 to vector<8x1xf32>
    %217 = arith.divf %215, %216 : vector<8x1xf32>
    %cst_45 = arith.constant 9.99999974E-6 : f32
    %218 = vector.broadcast %cst_45 : f32 to vector<8x1xf32>
    %219 = arith.addf %217, %218 : vector<8x1xf32>
    %220 = math.rsqrt %219 : vector<8x1xf32>
    %221 = vector.broadcast %220 : vector<8x1xf32> to vector<8x256xf32>
    %222 = arith.mulf %212, %221 : vector<8x256xf32>
    %223 = arith.addf %1, %222 : vector<8x256xf32>
    %224 = vector.shape_cast %223 : vector<8x256xf32> to vector<2x4x256xf32>
    %c0_46 = arith.constant 0 : index
    %c0_47 = arith.constant 0 : index
    %c0_48 = arith.constant 0 : index
    %225 = vector.load %arg6[%c0_46, %c0_47, %c0_48] : memref<2x4x256xf32, #tpu.memory_space<vmem>>, vector<2x4x256xf32>
    tpu.vector_store %arg6[%c0_46, %c0_47, %c0_48], %224 {strides = array<i32>} : memref<2x4x256xf32, #tpu.memory_space<vmem>>, vector<2x4x256xf32>,
    return
  }
  func.func @transform_0(%arg0: i32) -> (i32, i32, i32) {
    %c0_i32 = arith.constant 0 : i32
    %c0_i32_0 = arith.constant 0 : i32
    %c0_i32_1 = arith.constant 0 : i32
    return %arg0, %c0_i32, %c0_i32_0 : i32, i32, i32
  }
  func.func @transform_1(%arg0: i32) -> (i32, i32, i32) {
    %c0_i32 = arith.constant 0 : i32
    %c0_i32_0 = arith.constant 0 : i32
    %c0_i32_1 = arith.constant 0 : i32
    %c0_i32_2 = arith.constant 0 : i32
    return %c0_i32, %c0_i32_0, %c0_i32_1 : i32, i32, i32
  }
  func.func @transform_2(%arg0: i32) -> (i32, i32) {
    %c0_i32 = arith.constant 0 : i32
    %c0_i32_0 = arith.constant 0 : i32
    %c0_i32_1 = arith.constant 0 : i32
    return %c0_i32, %c0_i32_0 : i32, i32
  }
  func.func @transform_3(%arg0: i32) -> (i32, i32, i32) {
    %c0_i32 = arith.constant 0 : i32
    %c0_i32_0 = arith.constant 0 : i32
    %c0_i32_1 = arith.constant 0 : i32
    %c0_i32_2 = arith.constant 0 : i32
    return %c0_i32, %c0_i32_0, %c0_i32_1 : i32, i32, i32
  }
  func.func @transform_4(%arg0: i32) -> (i32, i32) {
    %c0_i32 = arith.constant 0 : i32
    %c0_i32_0 = arith.constant 0 : i32
    %c0_i32_1 = arith.constant 0 : i32
    return %c0_i32, %c0_i32_0 : i32, i32
  }
  func.func @transform_5(%arg0: i32) -> (i32, i32, i32) {
    %c0_i32 = arith.constant 0 : i32
    %c0_i32_0 = arith.constant 0 : i32
    %c0_i32_1 = arith.constant 0 : i32
    return %arg0, %c0_i32, %c0_i32_0 : i32, i32, i32
  }
}

</mosaic_0001>

<llo_original>
// kernel: tpu_custom_call.1
$region0: #{tpu_custom_call.1}
  #allocation0 [shape = 'u32[]', space=smem, size = 0x4, offset = 0x4, fixed_abs, tag = 'smem constant byte address 0x4 - core index']
  #allocation1 [shape = 'u32[144,128]{1,0:T(1,128)}', space=vmem, size = 0x12000, scoped, tag = 'internal scratch']
  %s0 = inlined_call_operand.vmem [shape: f32[2,4,256], index: 0, kind: input, shape index: {}]
  %s1 = inlined_call_operand.vmem [shape: f32[9,8,8], index: 1, kind: input, shape index: {}]
  %s2 = inlined_call_operand.vmem [shape: f32[8,1], index: 2, kind: input, shape index: {}]
  %s3 = inlined_call_operand.vmem [shape: f32[9,8,8], index: 3, kind: input, shape index: {}]
  %s4 = inlined_call_operand.vmem [shape: f32[8,1], index: 4, kind: input, shape index: {}]
  %s5 = inlined_call_operand.hbm [shape: f32[2,4,256], index: 5, kind: output, shape index: {}]
  %s6 = sld [smem:[#allocation0]]
  $region30: #{tpu_custom_call.1} parent=0
    _
  %s8 = ssub.s32 1, %s6
  %s9 = scalar_select 0, %s8, %s6
  $region1: #{tpu_custom_call.1} parent=0
    #allocation2 [shape = 'u8[8192]{0}', space=vmem, size = 0x2000, scoped, tag = 'output window, operand 0, single buffered']
    #allocation3 [shape = 's32[1]{0}', space=sflag, size = 0x4, scoped, tag = 'scoped memory for tpu_custom_call.1']
    %10 = vsyncpa [#allocation3], 0
    // Predicated region
    $region2: #{tpu_custom_call.1} parent=1 // pred_check
      _
    $region3: #{tpu_custom_call.1} parent=1 // pred_check_branch
      %12 = sbr.rel (0) target = $region5
    $region4: #{tpu_custom_call.1} parent=1 // pred_region
      _
    $region5: #{tpu_custom_call.1} parent=1 // pred_fallthru
      _
    // Predicated region
    $region6: #{tpu_custom_call.1} parent=1 // pred_check
      _
    $region7: #{tpu_custom_call.1} parent=1 // pred_check_branch
      %14 = sbr.rel (0) target = $region9
    $region8: #{tpu_custom_call.1} parent=1 // pred_region
      _
    $region9: #{tpu_custom_call.1} parent=1 // pred_fallthru
      _
    // Predicated region
    $region10: #{tpu_custom_call.1} parent=1 // pred_check
      _
    $region11: #{tpu_custom_call.1} parent=1 // pred_check_branch
      %16 = sbr.rel (0) target = $region13
    $region12: #{tpu_custom_call.1} parent=1 // pred_region
      _
    $region13: #{tpu_custom_call.1} parent=1 // pred_fallthru
      _
    // Predicated region
    $region14: #{tpu_custom_call.1} parent=1 // pred_check
      _
    $region15: #{tpu_custom_call.1} parent=1 // pred_check_branch
      %18 = sbr.rel (0) target = $region17
    $region16: #{tpu_custom_call.1} parent=1 // pred_region
      _
    $region17: #{tpu_custom_call.1} parent=1 // pred_fallthru
      _
    // Predicated region
    $region18: #{tpu_custom_call.1} parent=1 // pred_check
      _
    $region19: #{tpu_custom_call.1} parent=1 // pred_check_branch
      %20 = sbr.rel (0) target = $region21
    $region20: #{tpu_custom_call.1} parent=1 // pred_region
      _
    $region21: #{tpu_custom_call.1} parent=1 // pred_fallthru
      _
    %v21 = vld [vmem:[%s0] sm:$0xff]
    %v22 = vld [vmem:[%s0 + $0x8] sm:$0xff]
    %v23 = vlaneseq
    %v24 = vand.u32 %v23, 127
    %v25 = vadd.s32 %v24, 128
    %vm26 = vcmp.lt.s32.totalorder %v24, 0
    %v27 = vsub.s32 0, %v24
    %v28 = vsel %vm26, %v27, %v24
    %v29 = vshrl.u32 %v28, 4
    %v30 = vand.u32 %v28, 15
    %v31 = vsub.s32 0, %v30
    %v32 = vsel %vm26, %v31, %v30
    %vm33 = vcmp.lt.s32.totalorder %v25, 0
    %v34 = vsub.s32 0, %v25
    %v35 = vsel %vm33, %v34, %v25
    %v36 = vshrl.u32 %v35, 4
    %v37 = vand.u32 %v35, 15
    %v38 = vsub.s32 0, %v37
    %v39 = vsel %vm33, %v38, %v37
    %vm40 = vcmp.ne.s32.totalorder %v32, 0
    %vm41 = vcmp.ne.s32.totalorder %v39, 0
    %vm42 = vcmp.lt.s32.totalorder %v32, 0
    %vm43 = vcmp.lt.s32.totalorder %v39, 0
    %vm44 = vmand %vm42, %vm40
    %vm45 = vmand %vm43, %vm41
    %v46 = vadd.s32 %v32, 16
    %v47 = vadd.s32 %v39, 16
    %v48 = vsel %vm44, %v46, %v32
    %v49 = vsel %vm45, %v47, %v39
    %vm50 = vcmp.eq.s32.totalorder %v48, 0
    %vm51 = vcmp.eq.s32.totalorder %v49, 0
    %vm52 = vcmp.eq.s32.totalorder %v48, 15
    %vm53 = vcmp.eq.s32.totalorder %v49, 15
    %v54 = vld [vmem:[%s1] sm:$0xff]
    %v55 = vld [vmem:[%s1 + $0x8] sm:$0xff]
    %v56 = vld [vmem:[%s1 + $0x10] sm:$0xff]
    %v57 = vld [vmem:[%s1 + $0x18] sm:$0xff]
    %v58 = vld [vmem:[%s1 + $0x20] sm:$0xff]
    %v59 = vld [vmem:[%s1 + $0x28] sm:$0xff]
    %v60 = vld [vmem:[%s1 + $0x30] sm:$0xff]
    %v61 = vld [vmem:[%s1 + $0x38] sm:$0xff]
    %v62 = vld [vmem:[%s1 + $0x40] sm:$0xff]
    %v63 = vld [vmem:[%s2] sm:$0xff]
    %v64 = vld [vmem:[%s3] sm:$0xff]
    %v65 = vld [vmem:[%s3 + $0x8] sm:$0xff]
    %v66 = vld [vmem:[%s3 + $0x10] sm:$0xff]
    %v67 = vld [vmem:[%s3 + $0x18] sm:$0xff]
    %v68 = vld [vmem:[%s3 + $0x20] sm:$0xff]
    %v69 = vld [vmem:[%s3 + $0x28] sm:$0xff]
    %v70 = vld [vmem:[%s3 + $0x30] sm:$0xff]
    %v71 = vld [vmem:[%s3 + $0x38] sm:$0xff]
    %v72 = vld [vmem:[%s3 + $0x40] sm:$0xff]
    %v73 = vld [vmem:[%s4] sm:$0xff]
    %v76 = vcombine.low %v21, %v22
    %77 = vrot.lane.b32.xlu0 %v76, 112
    %v78 = vpop.permute.xlu0 %77
    %v80 = vcombine.high %v21, %v22
    %81 = vrot.lane.b32.xlu0 %v76, 16
    %v82 = vpop.permute.xlu0 %81
    %83 = vrot.lane.b32.xlu0 %v80, 16
    %v84 = vpop.permute.xlu0 %83
    %vm85 = vcmask 130048
    %v86 = vsel %vm85, %v82, %v84
    %v89 = vsel %vm85, %v78, %v82
    %90 = vrot.lane.b32.xlu0 %v80, 112
    %v91 = vpop.permute.xlu0 %90
    %vm92 = vcmask 916480
    %v93 = vsel %vm92, %v78, %v91
    %v97 = vsel %vm92, %v91, %v84
    %99 = vrot.lane.b32.xlu0 %v89, 1
    %v100 = vpop.permute.xlu0 %99
    %101 = vrot.lane.b32.xlu0 %v86, 1
    %v102 = vpop.permute.xlu0 %101
    %vm103 = vcmask 7168
    %v104 = vsel %vm103, %v100, %v102
    %v107 = vsel %vm103, %v89, %v100
    %108 = vrot.lane.b32.xlu0 %v89, 127
    %v109 = vpop.permute.xlu0 %108
    %110 = vrot.lane.b32.xlu0 %v86, 127
    %v111 = vpop.permute.xlu0 %110
    %vm112 = vcmask 1039360
    %v113 = vsel %vm112, %v109, %v111
    %v116 = vsel %vm112, %v111, %v86
    %v117 = vsel %vm50, 1, 0
    %v118 = vsel %vm51, 1, 0
    %vm119 = vcmp.eq.s32.totalorder %v117, 1
    %vm120 = vcmp.eq.s32.totalorder %v118, 1
    %v121 = vsel %vm119, %v113, %v107
    %v122 = vsel %vm120, %v116, %v104
    %v123 = vsel %vm52, 1, 0
    %v124 = vsel %vm53, 1, 0
    %vm125 = vcmp.eq.s32.totalorder %v123, 1
    %vm126 = vcmp.eq.s32.totalorder %v124, 1
    %v127 = vsel %vm125, %v107, %v113
    %v128 = vsel %vm126, %v104, %v116
    %vm129 = vcmask 64512
    %v131 = vsel %vm129, %v55, 0
    %133 = vmatprep.subr.mxu0 0.0
    %134 = vmatpush1.msra.mxu0 0.0
    %135 = vmatprep.subr.mxu0 0.0
    %136 = vmatpush1.msra.mxu0 0.0
    %137 = vmatprep.subr.mxu0 0.0
    %138 = vmatpush1.msra.mxu0 0.0
    %139 = vmatprep.subr.mxu0 0.0
    %140 = vmatpush1.msra.mxu0 0.0
    %141 = vmatprep.subr.mxu0 0.0
    %142 = vmatpush1.msra.mxu0 0.0
    %143 = vmatprep.subr.mxu0 0.0
    %144 = vmatpush1.msra.mxu0 0.0
    %145 = vmatprep.subr.mxu0 0.0
    %146 = vmatpush1.msra.mxu0 0.0
    %147 = vmatprep.subr.mxu0 0.0
    %148 = vmatpush1.msra.mxu0 0.0
    %149 = vmatprep.subr.mxu0 0.0
    %150 = vmatpush1.msra.mxu0 0.0
    %151 = vmatprep.subr.mxu0 0.0
    %152 = vmatpush1.msra.mxu0 0.0
    %153 = vmatprep.subr.mxu0 0.0
    %154 = vmatpush1.msra.mxu0 0.0
    %155 = vmatprep.subr.mxu0 0.0
    %156 = vmatpush1.msra.mxu0 0.0
    %157 = vmatprep.subr.mxu0 0.0
    %158 = vmatpush1.msra.mxu0 0.0
    %159 = vmatprep.subr.mxu0 0.0
    %160 = vmatpush1.msra.mxu0 0.0
    %161 = vmatprep.subr.mxu0 0.0
    %162 = vmatpush1.msra.mxu0 0.0
    %163 = vmatprep.subr.mxu0 %v86
    %164 = vmatpush1.msra.mxu0 %v89
    %165 = vmatprep.subr.mxu0 0.0
    %166 = vmatpush2.msra.mxu0 0.0
    %167 = vmatprep.subr.mxu0 0.0
    %168 = vmatpush2.msra.mxu0 0.0
    %169 = vmatprep.subr.mxu0 0.0
    %170 = vmatpush2.msra.mxu0 0.0
    %171 = vmatprep.subr.mxu0 0.0
    %172 = vmatpush2.msra.mxu0 0.0
    %173 = vmatprep.subr.mxu0 0.0
    %174 = vmatpush2.msra.mxu0 0.0
    %175 = vmatprep.subr.mxu0 0.0
    %176 = vmatpush2.msra.mxu0 0.0
    %177 = vmatprep.subr.mxu0 0.0
    %178 = vmatpush2.msra.mxu0 0.0
    %179 = vmatprep.subr.mxu0 0.0
    %180 = vmatpush2.msra.mxu0 0.0
    %181 = vmatprep.subr.mxu0 0.0
    %182 = vmatpush2.msra.mxu0 0.0
    %183 = vmatprep.subr.mxu0 0.0
    %184 = vmatpush2.msra.mxu0 0.0
    %185 = vmatprep.subr.mxu0 0.0
    %186 = vmatpush2.msra.mxu0 0.0
    %187 = vmatprep.subr.mxu0 0.0
    %188 = vmatpush2.msra.mxu0 0.0
    %189 = vmatprep.subr.mxu0 0.0
    %190 = vmatpush2.msra.mxu0 0.0
    %191 = vmatprep.subr.mxu0 0.0
    %192 = vmatpush2.msra.mxu0 0.0
    %193 = vmatprep.subr.mxu0 0.0
    %194 = vmatpush2.msra.mxu0 0.0
    %195 = vmatprep.subr.mxu0 0.0
    %196 = vmatpush2.msra.mxu0 0.0
    %197 = vmatprep.mubr.f32.mxu0 0.0
    %198 = vmatmul.mubr.f32.gmra.mxu0 %v131
    %v199 = vpop.f32.mrf.mxu0
    %v200 = vadd.f32 0.0, %v199
    %v201 = vpop.f32.mrf.mxu0
    %v202 = vadd.f32 0.0, %v201
    %203 = vdwg.mxu0
    %v205 = vsel %vm129, %v54, 0
    %207 = vmatprep.subr.mxu0 0.0
    %208 = vmatpush1.msra.mxu0 0.0
    %209 = vmatprep.subr.mxu0 0.0
    %210 = vmatpush1.msra.mxu0 0.0
    %211 = vmatprep.subr.mxu0 0.0
    %212 = vmatpush1.msra.mxu0 0.0
    %213 = vmatprep.subr.mxu0 0.0
    %214 = vmatpush1.msra.mxu0 0.0
    %215 = vmatprep.subr.mxu0 0.0
    %216 = vmatpush1.msra.mxu0 0.0
    %217 = vmatprep.subr.mxu0 0.0
    %218 = vmatpush1.msra.mxu0 0.0
    %219 = vmatprep.subr.mxu0 0.0
    %220 = vmatpush1.msra.mxu0 0.0
    %221 = vmatprep.subr.mxu0 0.0
    %222 = vmatpush1.msra.mxu0 0.0
    %223 = vmatprep.subr.mxu0 0.0
    %224 = vmatpush1.msra.mxu0 0.0
    %225 = vmatprep.subr.mxu0 0.0
    %226 = vmatpush1.msra.mxu0 0.0
    %227 = vmatprep.subr.mxu0 0.0
    %228 = vmatpush1.msra.mxu0 0.0
    %229 = vmatprep.subr.mxu0 0.0
    %230 = vmatpush1.msra.mxu0 0.0
    %231 = vmatprep.subr.mxu0 0.0
    %232 = vmatpush1.msra.mxu0 0.0
    %233 = vmatprep.subr.mxu0 0.0
    %234 = vmatpush1.msra.mxu0 0.0
    %235 = vmatprep.subr.mxu0 0.0
    %236 = vmatpush1.msra.mxu0 0.0
    %237 = vmatprep.subr.mxu0 %v122
    %238 = vmatpush1.msra.mxu0 %v121
    %239 = vmatprep.subr.mxu0 0.0
    %240 = vmatpush2.msra.mxu0 0.0
    %241 = vmatprep.subr.mxu0 0.0
    %242 = vmatpush2.msra.mxu0 0.0
    %243 = vmatprep.subr.mxu0 0.0
    %244 = vmatpush2.msra.mxu0 0.0
    %245 = vmatprep.subr.mxu0 0.0
    %246 = vmatpush2.msra.mxu0 0.0
    %247 = vmatprep.subr.mxu0 0.0
    %248 = vmatpush2.msra.mxu0 0.0
    %249 = vmatprep.subr.mxu0 0.0
    %250 = vmatpush2.msra.mxu0 0.0
    %251 = vmatprep.subr.mxu0 0.0
    %252 = vmatpush2.msra.mxu0 0.0
    %253 = vmatprep.subr.mxu0 0.0
    %254 = vmatpush2.msra.mxu0 0.0
    %255 = vmatprep.subr.mxu0 0.0
    %256 = vmatpush2.msra.mxu0 0.0
    %257 = vmatprep.subr.mxu0 0.0
    %258 = vmatpush2.msra.mxu0 0.0
    %259 = vmatprep.subr.mxu0 0.0
    %260 = vmatpush2.msra.mxu0 0.0
    %261 = vmatprep.subr.mxu0 0.0
    %262 = vmatpush2.msra.mxu0 0.0
    %263 = vmatprep.subr.mxu0 0.0
    %264 = vmatpush2.msra.mxu0 0.0
    %265 = vmatprep.subr.mxu0 0.0
    %266 = vmatpush2.msra.mxu0 0.0
    %267 = vmatprep.subr.mxu0 0.0
    %268 = vmatpush2.msra.mxu0 0.0
    %269 = vmatprep.subr.mxu0 0.0
    %270 = vmatpush2.msra.mxu0 0.0
    %271 = vmatprep.mubr.f32.mxu0 0.0
    %272 = vmatmul.mubr.f32.gmra.mxu0 %v205
    %v273 = vpop.f32.mrf.mxu0
    %v274 = vadd.f32 %v200, %v273
    %v275 = vpop.f32.mrf.mxu0
    %v276 = vadd.f32 %v202, %v275
    %277 = vdwg.mxu0
    %v279 = vsel %vm129, %v56, 0
    %281 = vmatprep.subr.mxu0 0.0
    %282 = vmatpush1.msra.mxu0 0.0
    %283 = vmatprep.subr.mxu0 0.0
    %284 = vmatpush1.msra.mxu0 0.0
    %285 = vmatprep.subr.mxu0 0.0
    %286 = vmatpush1.msra.mxu0 0.0
    %287 = vmatprep.subr.mxu0 0.0
    %288 = vmatpush1.msra.mxu0 0.0
    %289 = vmatprep.subr.mxu0 0.0
    %290 = vmatpush1.msra.mxu0 0.0
    %291 = vmatprep.subr.mxu0 0.0
    %292 = vmatpush1.msra.mxu0 0.0
    %293 = vmatprep.subr.mxu0 0.0
    %294 = vmatpush1.msra.mxu0 0.0
    %295 = vmatprep.subr.mxu0 0.0
    %296 = vmatpush1.msra.mxu0 0.0
    %297 = vmatprep.subr.mxu0 0.0
    %298 = vmatpush1.msra.mxu0 0.0
    %299 = vmatprep.subr.mxu0 0.0
    %300 = vmatpush1.msra.mxu0 0.0
    %301 = vmatprep.subr.mxu0 0.0
    %302 = vmatpush1.msra.mxu0 0.0
    %303 = vmatprep.subr.mxu0 0.0
    %304 = vmatpush1.msra.mxu0 0.0
    %305 = vmatprep.subr.mxu0 0.0
    %306 = vmatpush1.msra.mxu0 0.0
    %307 = vmatprep.subr.mxu0 0.0
    %308 = vmatpush1.msra.mxu0 0.0
    %309 = vmatprep.subr.mxu0 0.0
    %310 = vmatpush1.msra.mxu0 0.0
    %311 = vmatprep.subr.mxu0 %v128
    %312 = vmatpush1.msra.mxu0 %v127
    %313 = vmatprep.subr.mxu0 0.0
    %314 = vmatpush2.msra.mxu0 0.0
    %315 = vmatprep.subr.mxu0 0.0
    %316 = vmatpush2.msra.mxu0 0.0
    %317 = vmatprep.subr.mxu0 0.0
    %318 = vmatpush2.msra.mxu0 0.0
    %319 = vmatprep.subr.mxu0 0.0
    %320 = vmatpush2.msra.mxu0 0.0
    %321 = vmatprep.subr.mxu0 0.0
    %322 = vmatpush2.msra.mxu0 0.0
    %323 = vmatprep.subr.mxu0 0.0
    %324 = vmatpush2.msra.mxu0 0.0
    %325 = vmatprep.subr.mxu0 0.0
    %326 = vmatpush2.msra.mxu0 0.0
    %327 = vmatprep.subr.mxu0 0.0
    %328 = vmatpush2.msra.mxu0 0.0
    %329 = vmatprep.subr.mxu0 0.0
    %330 = vmatpush2.msra.mxu0 0.0
    %331 = vmatprep.subr.mxu0 0.0
    %332 = vmatpush2.msra.mxu0 0.0
    %333 = vmatprep.subr.mxu0 0.0
    %334 = vmatpush2.msra.mxu0 0.0
    %335 = vmatprep.subr.mxu0 0.0
    %336 = vmatpush2.msra.mxu0 0.0
    %337 = vmatprep.subr.mxu0 0.0
    %338 = vmatpush2.msra.mxu0 0.0
    %339 = vmatprep.subr.mxu0 0.0
    %340 = vmatpush2.msra.mxu0 0.0
    %341 = vmatprep.subr.mxu0 0.0
    %342 = vmatpush2.msra.mxu0 0.0
    %343 = vmatprep.subr.mxu0 0.0
    %344 = vmatpush2.msra.mxu0 0.0
    %345 = vmatprep.mubr.f32.mxu0 0.0
    %346 = vmatmul.mubr.f32.gmra.mxu0 %v279
    %v347 = vpop.f32.mrf.mxu0
    %v348 = vadd.f32 0.0, %v347
    %v349 = vpop.f32.mrf.mxu0
    %v350 = vadd.f32 0.0, %v349
    %351 = vdwg.mxu0
    %v352 = vadd.f32 %v274, %v348
    %v353 = vadd.f32 %v276, %v350
    %355 = vrot.lane.b32.xlu0 %v76, 1
    %v356 = vpop.permute.xlu0 %355
    %357 = vrot.lane.b32.xlu0 %v80, 1
    %v358 = vpop.permute.xlu0 %357
    %v359 = vsel %vm103, %v356, %v358
    %v362 = vsel %vm103, %v76, %v356
    %363 = vrot.lane.b32.xlu0 %v76, 127
    %v364 = vpop.permute.xlu0 %363
    %365 = vrot.lane.b32.xlu0 %v80, 127
    %v366 = vpop.permute.xlu0 %365
    %v367 = vsel %vm112, %v364, %v366
    %v371 = vsel %vm112, %v366, %v80
    %v372 = vsel %vm119, %v367, %v362
    %v373 = vsel %vm120, %v371, %v359
    %v374 = vsel %vm125, %v362, %v367
    %v375 = vsel %vm126, %v359, %v371
    %v377 = vsel %vm129, %v57, 0
    %379 = vmatprep.subr.mxu0 0.0
    %380 = vmatpush1.msra.mxu0 0.0
    %381 = vmatprep.subr.mxu0 0.0
    %382 = vmatpush1.msra.mxu0 0.0
    %383 = vmatprep.subr.mxu0 0.0
    %384 = vmatpush1.msra.mxu0 0.0
    %385 = vmatprep.subr.mxu0 0.0
    %386 = vmatpush1.msra.mxu0 0.0
    %387 = vmatprep.subr.mxu0 0.0
    %388 = vmatpush1.msra.mxu0 0.0
    %389 = vmatprep.subr.mxu0 0.0
    %390 = vmatpush1.msra.mxu0 0.0
    %391 = vmatprep.subr.mxu0 0.0
    %392 = vmatpush1.msra.mxu0 0.0
    %393 = vmatprep.subr.mxu0 0.0
    %394 = vmatpush1.msra.mxu0 0.0
    %395 = vmatprep.subr.mxu0 0.0
    %396 = vmatpush1.msra.mxu0 0.0
    %397 = vmatprep.subr.mxu0 0.0
    %398 = vmatpush1.msra.mxu0 0.0
    %399 = vmatprep.subr.mxu0 0.0
    %400 = vmatpush1.msra.mxu0 0.0
    %401 = vmatprep.subr.mxu0 0.0
    %402 = vmatpush1.msra.mxu0 0.0
    %403 = vmatprep.subr.mxu0 0.0
    %404 = vmatpush1.msra.mxu0 0.0
    %405 = vmatprep.subr.mxu0 0.0
    %406 = vmatpush1.msra.mxu0 0.0
    %407 = vmatprep.subr.mxu0 0.0
    %408 = vmatpush1.msra.mxu0 0.0
    %409 = vmatprep.subr.mxu0 %v373
    %410 = vmatpush1.msra.mxu0 %v372
    %411 = vmatprep.subr.mxu0 0.0
    %412 = vmatpush2.msra.mxu0 0.0
    %413 = vmatprep.subr.mxu0 0.0
    %414 = vmatpush2.msra.mxu0 0.0
    %415 = vmatprep.subr.mxu0 0.0
    %416 = vmatpush2.msra.mxu0 0.0
    %417 = vmatprep.subr.mxu0 0.0
    %418 = vmatpush2.msra.mxu0 0.0
    %419 = vmatprep.subr.mxu0 0.0
    %420 = vmatpush2.msra.mxu0 0.0
    %421 = vmatprep.subr.mxu0 0.0
    %422 = vmatpush2.msra.mxu0 0.0
    %423 = vmatprep.subr.mxu0 0.0
    %424 = vmatpush2.msra.mxu0 0.0
    %425 = vmatprep.subr.mxu0 0.0
    %426 = vmatpush2.msra.mxu0 0.0
    %427 = vmatprep.subr.mxu0 0.0
    %428 = vmatpush2.msra.mxu0 0.0
    %429 = vmatprep.subr.mxu0 0.0
    %430 = vmatpush2.msra.mxu0 0.0
    %431 = vmatprep.subr.mxu0 0.0
    %432 = vmatpush2.msra.mxu0 0.0
    %433 = vmatprep.subr.mxu0 0.0
    %434 = vmatpush2.msra.mxu0 0.0
    %435 = vmatprep.subr.mxu0 0.0
    %436 = vmatpush2.msra.mxu0 0.0
    %437 = vmatprep.subr.mxu0 0.0
    %438 = vmatpush2.msra.mxu0 0.0
    %439 = vmatprep.subr.mxu0 0.0
    %440 = vmatpush2.msra.mxu0 0.0
    %441 = vmatprep.subr.mxu0 0.0
    %442 = vmatpush2.msra.mxu0 0.0
    %443 = vmatprep.mubr.f32.mxu0 0.0
    %444 = vmatmul.mubr.f32.gmra.mxu0 %v377
    %v445 = vpop.f32.mrf.mxu0
    %v446 = vadd.f32 0.0, %v445
    %v447 = vpop.f32.mrf.mxu0
    %v448 = vadd.f32 0.0, %v447
    %449 = vdwg.mxu0
    %v450 = vadd.f32 %v352, %v446
    %v451 = vadd.f32 %v353, %v448
    %v453 = vsel %vm129, %v58, 0
    %455 = vmatprep.subr.mxu0 0.0
    %456 = vmatpush1.msra.mxu0 0.0
    %457 = vmatprep.subr.mxu0 0.0
    %458 = vmatpush1.msra.mxu0 0.0
    %459 = vmatprep.subr.mxu0 0.0
    %460 = vmatpush1.msra.mxu0 0.0
    %461 = vmatprep.subr.mxu0 0.0
    %462 = vmatpush1.msra.mxu0 0.0
    %463 = vmatprep.subr.mxu0 0.0
    %464 = vmatpush1.msra.mxu0 0.0
    %465 = vmatprep.subr.mxu0 0.0
    %466 = vmatpush1.msra.mxu0 0.0
    %467 = vmatprep.subr.mxu0 0.0
    %468 = vmatpush1.msra.mxu0 0.0
    %469 = vmatprep.subr.mxu0 0.0
    %470 = vmatpush1.msra.mxu0 0.0
    %471 = vmatprep.subr.mxu0 0.0
    %472 = vmatpush1.msra.mxu0 0.0
    %473 = vmatprep.subr.mxu0 0.0
    %474 = vmatpush1.msra.mxu0 0.0
    %475 = vmatprep.subr.mxu0 0.0
    %476 = vmatpush1.msra.mxu0 0.0
    %477 = vmatprep.subr.mxu0 0.0
    %478 = vmatpush1.msra.mxu0 0.0
    %479 = vmatprep.subr.mxu0 0.0
    %480 = vmatpush1.msra.mxu0 0.0
    %481 = vmatprep.subr.mxu0 0.0
    %482 = vmatpush1.msra.mxu0 0.0
    %483 = vmatprep.subr.mxu0 0.0
    %484 = vmatpush1.msra.mxu0 0.0
    %485 = vmatprep.subr.mxu0 %v80
    %486 = vmatpush1.msra.mxu0 %v76
    %487 = vmatprep.subr.mxu0 0.0
    %488 = vmatpush2.msra.mxu0 0.0
    %489 = vmatprep.subr.mxu0 0.0
    %490 = vmatpush2.msra.mxu0 0.0
    %491 = vmatprep.subr.mxu0 0.0
    %492 = vmatpush2.msra.mxu0 0.0
    %493 = vmatprep.subr.mxu0 0.0
    %494 = vmatpush2.msra.mxu0 0.0
    %495 = vmatprep.subr.mxu0 0.0
    %496 = vmatpush2.msra.mxu0 0.0
    %497 = vmatprep.subr.mxu0 0.0
    %498 = vmatpush2.msra.mxu0 0.0
    %499 = vmatprep.subr.mxu0 0.0
    %500 = vmatpush2.msra.mxu0 0.0
    %501 = vmatprep.subr.mxu0 0.0
    %502 = vmatpush2.msra.mxu0 0.0
    %503 = vmatprep.subr.mxu0 0.0
    %504 = vmatpush2.msra.mxu0 0.0
    %505 = vmatprep.subr.mxu0 0.0
    %506 = vmatpush2.msra.mxu0 0.0
    %507 = vmatprep.subr.mxu0 0.0
    %508 = vmatpush2.msra.mxu0 0.0
    %509 = vmatprep.subr.mxu0 0.0
    %510 = vmatpush2.msra.mxu0 0.0
    %511 = vmatprep.subr.mxu0 0.0
    %512 = vmatpush2.msra.mxu0 0.0
    %513 = vmatprep.subr.mxu0 0.0
    %514 = vmatpush2.msra.mxu0 0.0
    %515 = vmatprep.subr.mxu0 0.0
    %516 = vmatpush2.msra.mxu0 0.0
    %517 = vmatprep.subr.mxu0 0.0
    %518 = vmatpush2.msra.mxu0 0.0
    %519 = vmatprep.mubr.f32.mxu0 0.0
    %520 = vmatmul.mubr.f32.gmra.mxu0 %v453
    %v521 = vpop.f32.mrf.mxu0
    %v522 = vadd.f32 0.0, %v521
    %v523 = vpop.f32.mrf.mxu0
    %v524 = vadd.f32 0.0, %v523
    %525 = vdwg.mxu0
    %v526 = vadd.f32 %v450, %v522
    %v527 = vadd.f32 %v451, %v524
    %v529 = vsel %vm129, %v59, 0
    %531 = vmatprep.subr.mxu0 0.0
    %532 = vmatpush1.msra.mxu0 0.0
    %533 = vmatprep.subr.mxu0 0.0
    %534 = vmatpush1.msra.mxu0 0.0
    %535 = vmatprep.subr.mxu0 0.0
    %536 = vmatpush1.msra.mxu0 0.0
    %537 = vmatprep.subr.mxu0 0.0
    %538 = vmatpush1.msra.mxu0 0.0
    %539 = vmatprep.subr.mxu0 0.0
    %540 = vmatpush1.msra.mxu0 0.0
    %541 = vmatprep.subr.mxu0 0.0
    %542 = vmatpush1.msra.mxu0 0.0
    %543 = vmatprep.subr.mxu0 0.0
    %544 = vmatpush1.msra.mxu0 0.0
    %545 = vmatprep.subr.mxu0 0.0
    %546 = vmatpush1.msra.mxu0 0.0
    %547 = vmatprep.subr.mxu0 0.0
    %548 = vmatpush1.msra.mxu0 0.0
    %549 = vmatprep.subr.mxu0 0.0
    %550 = vmatpush1.msra.mxu0 0.0
    %551 = vmatprep.subr.mxu0 0.0
    %552 = vmatpush1.msra.mxu0 0.0
    %553 = vmatprep.subr.mxu0 0.0
    %554 = vmatpush1.msra.mxu0 0.0
    %555 = vmatprep.subr.mxu0 0.0
    %556 = vmatpush1.msra.mxu0 0.0
    %557 = vmatprep.subr.mxu0 0.0
    %558 = vmatpush1.msra.mxu0 0.0
    %559 = vmatprep.subr.mxu0 0.0
    %560 = vmatpush1.msra.mxu0 0.0
    %561 = vmatprep.subr.mxu0 %v375
    %562 = vmatpush1.msra.mxu0 %v374
    %563 = vmatprep.subr.mxu0 0.0
    %564 = vmatpush2.msra.mxu0 0.0
    %565 = vmatprep.subr.mxu0 0.0
    %566 = vmatpush2.msra.mxu0 0.0
    %567 = vmatprep.subr.mxu0 0.0
    %568 = vmatpush2.msra.mxu0 0.0
    %569 = vmatprep.subr.mxu0 0.0
    %570 = vmatpush2.msra.mxu0 0.0
    %571 = vmatprep.subr.mxu0 0.0
    %572 = vmatpush2.msra.mxu0 0.0
    %573 = vmatprep.subr.mxu0 0.0
    %574 = vmatpush2.msra.mxu0 0.0
    %575 = vmatprep.subr.mxu0 0.0
    %576 = vmatpush2.msra.mxu0 0.0
    %577 = vmatprep.subr.mxu0 0.0
    %578 = vmatpush2.msra.mxu0 0.0
    %579 = vmatprep.subr.mxu0 0.0
    %580 = vmatpush2.msra.mxu0 0.0
    %581 = vmatprep.subr.mxu0 0.0
    %582 = vmatpush2.msra.mxu0 0.0
    %583 = vmatprep.subr.mxu0 0.0
    %584 = vmatpush2.msra.mxu0 0.0
    %585 = vmatprep.subr.mxu0 0.0
    %586 = vmatpush2.msra.mxu0 0.0
    %587 = vmatprep.subr.mxu0 0.0
    %588 = vmatpush2.msra.mxu0 0.0
    %589 = vmatprep.subr.mxu0 0.0
    %590 = vmatpush2.msra.mxu0 0.0
    %591 = vmatprep.subr.mxu0 0.0
    %592 = vmatpush2.msra.mxu0 0.0
    %593 = vmatprep.subr.mxu0 0.0
    %594 = vmatpush2.msra.mxu0 0.0
    %595 = vmatprep.mubr.f32.mxu0 0.0
    %596 = vmatmul.mubr.f32.gmra.mxu0 %v529
    %v597 = vpop.f32.mrf.mxu0
    %v598 = vadd.f32 0.0, %v597
    %v599 = vpop.f32.mrf.mxu0
    %v600 = vadd.f32 0.0, %v599
    %601 = vdwg.mxu0
    %v602 = vadd.f32 %v526, %v598
    %v603 = vadd.f32 %v527, %v600
    %605 = vrot.lane.b32.xlu0 %v93, 1
    %v606 = vpop.permute.xlu0 %605
    %607 = vrot.lane.b32.xlu0 %v97, 1
    %v608 = vpop.permute.xlu0 %607
    %v609 = vsel %vm103, %v606, %v608
    %v612 = vsel %vm103, %v93, %v606
    %613 = vrot.lane.b32.xlu0 %v93, 127
    %v614 = vpop.permute.xlu0 %613
    %615 = vrot.lane.b32.xlu0 %v97, 127
    %v616 = vpop.permute.xlu0 %615
    %v617 = vsel %vm112, %v614, %v616
    %v620 = vsel %vm112, %v616, %v97
    %v621 = vsel %vm119, %v617, %v612
    %v622 = vsel %vm120, %v620, %v609
    %v623 = vsel %vm125, %v612, %v617
    %v624 = vsel %vm126, %v609, %v620
    %v626 = vsel %vm129, %v60, 0
    %628 = vmatprep.subr.mxu0 0.0
    %629 = vmatpush1.msra.mxu0 0.0
    %630 = vmatprep.subr.mxu0 0.0
    %631 = vmatpush1.msra.mxu0 0.0
    %632 = vmatprep.subr.mxu0 0.0
    %633 = vmatpush1.msra.mxu0 0.0
    %634 = vmatprep.subr.mxu0 0.0
    %635 = vmatpush1.msra.mxu0 0.0
    %636 = vmatprep.subr.mxu0 0.0
    %637 = vmatpush1.msra.mxu0 0.0
    %638 = vmatprep.subr.mxu0 0.0
    %639 = vmatpush1.msra.mxu0 0.0
    %640 = vmatprep.subr.mxu0 0.0
    %641 = vmatpush1.msra.mxu0 0.0
    %642 = vmatprep.subr.mxu0 0.0
    %643 = vmatpush1.msra.mxu0 0.0
    %644 = vmatprep.subr.mxu0 0.0
    %645 = vmatpush1.msra.mxu0 0.0
    %646 = vmatprep.subr.mxu0 0.0
    %647 = vmatpush1.msra.mxu0 0.0
    %648 = vmatprep.subr.mxu0 0.0
    %649 = vmatpush1.msra.mxu0 0.0
    %650 = vmatprep.subr.mxu0 0.0
    %651 = vmatpush1.msra.mxu0 0.0
    %652 = vmatprep.subr.mxu0 0.0
    %653 = vmatpush1.msra.mxu0 0.0
    %654 = vmatprep.subr.mxu0 0.0
    %655 = vmatpush1.msra.mxu0 0.0
    %656 = vmatprep.subr.mxu0 0.0
    %657 = vmatpush1.msra.mxu0 0.0
    %658 = vmatprep.subr.mxu0 %v622
    %659 = vmatpush1.msra.mxu0 %v621
    %660 = vmatprep.subr.mxu0 0.0
    %661 = vmatpush2.msra.mxu0 0.0
    %662 = vmatprep.subr.mxu0 0.0
    %663 = vmatpush2.msra.mxu0 0.0
    %664 = vmatprep.subr.mxu0 0.0
    %665 = vmatpush2.msra.mxu0 0.0
    %666 = vmatprep.subr.mxu0 0.0
    %667 = vmatpush2.msra.mxu0 0.0
    %668 = vmatprep.subr.mxu0 0.0
    %669 = vmatpush2.msra.mxu0 0.0
    %670 = vmatprep.subr.mxu0 0.0
    %671 = vmatpush2.msra.mxu0 0.0
    %672 = vmatprep.subr.mxu0 0.0
    %673 = vmatpush2.msra.mxu0 0.0
    %674 = vmatprep.subr.mxu0 0.0
    %675 = vmatpush2.msra.mxu0 0.0
    %676 = vmatprep.subr.mxu0 0.0
    %677 = vmatpush2.msra.mxu0 0.0
    %678 = vmatprep.subr.mxu0 0.0
    %679 = vmatpush2.msra.mxu0 0.0
    %680 = vmatprep.subr.mxu0 0.0
    %681 = vmatpush2.msra.mxu0 0.0
    %682 = vmatprep.subr.mxu0 0.0
    %683 = vmatpush2.msra.mxu0 0.0
    %684 = vmatprep.subr.mxu0 0.0
    %685 = vmatpush2.msra.mxu0 0.0
    %686 = vmatprep.subr.mxu0 0.0
    %687 = vmatpush2.msra.mxu0 0.0
    %688 = vmatprep.subr.mxu0 0.0
    %689 = vmatpush2.msra.mxu0 0.0
    %690 = vmatprep.subr.mxu0 0.0
    %691 = vmatpush2.msra.mxu0 0.0
    %692 = vmatprep.mubr.f32.mxu0 0.0
    %693 = vmatmul.mubr.f32.gmra.mxu0 %v626
    %v694 = vpop.f32.mrf.mxu0
    %v695 = vadd.f32 0.0, %v694
    %v696 = vpop.f32.mrf.mxu0
    %v697 = vadd.f32 0.0, %v696
    %698 = vdwg.mxu0
    %v699 = vadd.f32 %v602, %v695
    %v700 = vadd.f32 %v603, %v697
    %v702 = vsel %vm129, %v61, 0
    %704 = vmatprep.subr.mxu0 0.0
    %705 = vmatpush1.msra.mxu0 0.0
    %706 = vmatprep.subr.mxu0 0.0
    %707 = vmatpush1.msra.mxu0 0.0
    %708 = vmatprep.subr.mxu0 0.0
    %709 = vmatpush1.msra.mxu0 0.0
    %710 = vmatprep.subr.mxu0 0.0
    %711 = vmatpush1.msra.mxu0 0.0
    %712 = vmatprep.subr.mxu0 0.0
    %713 = vmatpush1.msra.mxu0 0.0
    %714 = vmatprep.subr.mxu0 0.0
    %715 = vmatpush1.msra.mxu0 0.0
    %716 = vmatprep.subr.mxu0 0.0
    %717 = vmatpush1.msra.mxu0 0.0
    %718 = vmatprep.subr.mxu0 0.0
    %719 = vmatpush1.msra.mxu0 0.0
    %720 = vmatprep.subr.mxu0 0.0
    %721 = vmatpush1.msra.mxu0 0.0
    %722 = vmatprep.subr.mxu0 0.0
    %723 = vmatpush1.msra.mxu0 0.0
    %724 = vmatprep.subr.mxu0 0.0
    %725 = vmatpush1.msra.mxu0 0.0
    %726 = vmatprep.subr.mxu0 0.0
    %727 = vmatpush1.msra.mxu0 0.0
    %728 = vmatprep.subr.mxu0 0.0
    %729 = vmatpush1.msra.mxu0 0.0
    %730 = vmatprep.subr.mxu0 0.0
    %731 = vmatpush1.msra.mxu0 0.0
    %732 = vmatprep.subr.mxu0 0.0
    %733 = vmatpush1.msra.mxu0 0.0
    %734 = vmatprep.subr.mxu0 %v97
    %735 = vmatpush1.msra.mxu0 %v93
    %736 = vmatprep.subr.mxu0 0.0
    %737 = vmatpush2.msra.mxu0 0.0
    %738 = vmatprep.subr.mxu0 0.0
    %739 = vmatpush2.msra.mxu0 0.0
    %740 = vmatprep.subr.mxu0 0.0
    %741 = vmatpush2.msra.mxu0 0.0
    %742 = vmatprep.subr.mxu0 0.0
    %743 = vmatpush2.msra.mxu0 0.0
    %744 = vmatprep.subr.mxu0 0.0
    %745 = vmatpush2.msra.mxu0 0.0
    %746 = vmatprep.subr.mxu0 0.0
    %747 = vmatpush2.msra.mxu0 0.0
    %748 = vmatprep.subr.mxu0 0.0
    %749 = vmatpush2.msra.mxu0 0.0
    %750 = vmatprep.subr.mxu0 0.0
    %751 = vmatpush2.msra.mxu0 0.0
    %752 = vmatprep.subr.mxu0 0.0
    %753 = vmatpush2.msra.mxu0 0.0
    %754 = vmatprep.subr.mxu0 0.0
    %755 = vmatpush2.msra.mxu0 0.0
    %756 = vmatprep.subr.mxu0 0.0
    %757 = vmatpush2.msra.mxu0 0.0
    %758 = vmatprep.subr.mxu0 0.0
    %759 = vmatpush2.msra.mxu0 0.0
    %760 = vmatprep.subr.mxu0 0.0
    %761 = vmatpush2.msra.mxu0 0.0
    %762 = vmatprep.subr.mxu0 0.0
    %763 = vmatpush2.msra.mxu0 0.0
    %764 = vmatprep.subr.mxu0 0.0
    %765 = vmatpush2.msra.mxu0 0.0
    %766 = vmatprep.subr.mxu0 0.0
    %767 = vmatpush2.msra.mxu0 0.0
    %768 = vmatprep.mubr.f32.mxu0 0.0
    %769 = vmatmul.mubr.f32.gmra.mxu0 %v702
    %v770 = vpop.f32.mrf.mxu0
    %v771 = vadd.f32 0.0, %v770
    %v772 = vpop.f32.mrf.mxu0
    %v773 = vadd.f32 0.0, %v772
    %774 = vdwg.mxu0
    %v775 = vadd.f32 %v699, %v771
    %v776 = vadd.f32 %v700, %v773
    %v778 = vsel %vm129, %v62, 0
    %780 = vmatprep.subr.mxu0 0.0
    %781 = vmatpush1.msra.mxu0 0.0
    %782 = vmatprep.subr.mxu0 0.0
    %783 = vmatpush1.msra.mxu0 0.0
    %784 = vmatprep.subr.mxu0 0.0
    %785 = vmatpush1.msra.mxu0 0.0
    %786 = vmatprep.subr.mxu0 0.0
    %787 = vmatpush1.msra.mxu0 0.0
    %788 = vmatprep.subr.mxu0 0.0
    %789 = vmatpush1.msra.mxu0 0.0
    %790 = vmatprep.subr.mxu0 0.0
    %791 = vmatpush1.msra.mxu0 0.0
    %792 = vmatprep.subr.mxu0 0.0
    %793 = vmatpush1.msra.mxu0 0.0
    %794 = vmatprep.subr.mxu0 0.0
    %795 = vmatpush1.msra.mxu0 0.0
    %796 = vmatprep.subr.mxu0 0.0
    %797 = vmatpush1.msra.mxu0 0.0
    %798 = vmatprep.subr.mxu0 0.0
    %799 = vmatpush1.msra.mxu0 0.0
    %800 = vmatprep.subr.mxu0 0.0
    %801 = vmatpush1.msra.mxu0 0.0
    %802 = vmatprep.subr.mxu0 0.0
    %803 = vmatpush1.msra.mxu0 0.0
    %804 = vmatprep.subr.mxu0 0.0
    %805 = vmatpush1.msra.mxu0 0.0
    %806 = vmatprep.subr.mxu0 0.0
    %807 = vmatpush1.msra.mxu0 0.0
    %808 = vmatprep.subr.mxu0 0.0
    %809 = vmatpush1.msra.mxu0 0.0
    %810 = vmatprep.subr.mxu0 %v624
    %811 = vmatpush1.msra.mxu0 %v623
    %812 = vmatprep.subr.mxu0 0.0
    %813 = vmatpush2.msra.mxu0 0.0
    %814 = vmatprep.subr.mxu0 0.0
    %815 = vmatpush2.msra.mxu0 0.0
    %816 = vmatprep.subr.mxu0 0.0
    %817 = vmatpush2.msra.mxu0 0.0
    %818 = vmatprep.subr.mxu0 0.0
    %819 = vmatpush2.msra.mxu0 0.0
    %820 = vmatprep.subr.mxu0 0.0
    %821 = vmatpush2.msra.mxu0 0.0
    %822 = vmatprep.subr.mxu0 0.0
    %823 = vmatpush2.msra.mxu0 0.0
    %824 = vmatprep.subr.mxu0 0.0
    %825 = vmatpush2.msra.mxu0 0.0
    %826 = vmatprep.subr.mxu0 0.0
    %827 = vmatpush2.msra.mxu0 0.0
    %828 = vmatprep.subr.mxu0 0.0
    %829 = vmatpush2.msra.mxu0 0.0
    %830 = vmatprep.subr.mxu0 0.0
    %831 = vmatpush2.msra.mxu0 0.0
    %832 = vmatprep.subr.mxu0 0.0
    %833 = vmatpush2.msra.mxu0 0.0
    %834 = vmatprep.subr.mxu0 0.0
    %835 = vmatpush2.msra.mxu0 0.0
    %836 = vmatprep.subr.mxu0 0.0
    %837 = vmatpush2.msra.mxu0 0.0
    %838 = vmatprep.subr.mxu0 0.0
    %839 = vmatpush2.msra.mxu0 0.0
    %840 = vmatprep.subr.mxu0 0.0
    %841 = vmatpush2.msra.mxu0 0.0
    %842 = vmatprep.subr.mxu0 0.0
    %843 = vmatpush2.msra.mxu0 0.0
    %844 = vmatprep.mubr.f32.mxu0 0.0
    %845 = vmatmul.mubr.f32.gmra.mxu0 %v778
    %v846 = vpop.f32.mrf.mxu0
    %v847 = vadd.f32 0.0, %v846
    %v848 = vpop.f32.mrf.mxu0
    %v849 = vadd.f32 0.0, %v848
    %850 = vdwg.mxu0
    %v851 = vadd.f32 %v775, %v847
    %v852 = vadd.f32 %v776, %v849
    %854 = vset.pattern.permute.xlu0 0
    %855 = vperm.xlu0 %854, %v63
    %v856 = vpop.permute.xlu0 %855
    %v858 = vadd.f32 %v851, %v856
    %v859 = vadd.f32 %v852, %v856
    %v860 = vadd.f32 %v858, %v859
    %861 = vadd.xlane.f32.xlu0 %v860
    %v862 = vpop.xlane.xlu0 %861
    %v863 = vrcp.pop 256.0
    %v864 = vmul.f32 %v862, %v863
    %v865 = vsub.f32 %v858, %v864
    %v866 = vsub.f32 %v859, %v864
    %v867 = vmul.f32 %v865, %v865
    %v868 = vmul.f32 %v866, %v866
    %v869 = vadd.f32 %v867, %v868
    %870 = vadd.xlane.f32.xlu0 %v869
    %v871 = vpop.xlane.xlu0 %870
    %v872 = vmul.f32 %v871, %v863
    %v873 = vadd.f32 %v872, 1e-05
    %v874 = vrsqrt.pop %v873
    %v875 = vmul.f32 %v865, %v874
    %v876 = vmul.f32 %v866, %v874
    %v877 = vmax.f32 %v875, 0.0
    %v878 = vmax.f32 %v876, 0.0
    %880 = vrot.lane.b32.xlu0 %v877, 112
    %v881 = vpop.permute.xlu0 %880
    %884 = vrot.lane.b32.xlu0 %v877, 16
    %v885 = vpop.permute.xlu0 %884
    %886 = vrot.lane.b32.xlu0 %v878, 16
    %v887 = vpop.permute.xlu0 %886
    %v888 = vsel %vm85, %v885, %v887
    %v891 = vsel %vm85, %v881, %v885
    %892 = vrot.lane.b32.xlu0 %v878, 112
    %v893 = vpop.permute.xlu0 %892
    %v894 = vsel %vm92, %v881, %v893
    %v898 = vsel %vm92, %v893, %v887
    %900 = vrot.lane.b32.xlu0 %v891, 1
    %v901 = vpop.permute.xlu0 %900
    %902 = vrot.lane.b32.xlu0 %v888, 1
    %v903 = vpop.permute.xlu0 %902
    %v904 = vsel %vm103, %v901, %v903
    %v907 = vsel %vm103, %v891, %v901
    %908 = vrot.lane.b32.xlu0 %v891, 127
    %v909 = vpop.permute.xlu0 %908
    %910 = vrot.lane.b32.xlu0 %v888, 127
    %v911 = vpop.permute.xlu0 %910
    %v912 = vsel %vm112, %v909, %v911
    %v915 = vsel %vm112, %v911, %v888
    %v916 = vsel %vm119, %v912, %v907
    %v917 = vsel %vm120, %v915, %v904
    %v918 = vsel %vm125, %v907, %v912
    %v919 = vsel %vm126, %v904, %v915
    %v921 = vsel %vm129, %v65, 0
    %923 = vmatprep.subr.mxu0 0.0
    %924 = vmatpush1.msra.mxu0 0.0
    %925 = vmatprep.subr.mxu0 0.0
    %926 = vmatpush1.msra.mxu0 0.0
    %927 = vmatprep.subr.mxu0 0.0
    %928 = vmatpush1.msra.mxu0 0.0
    %929 = vmatprep.subr.mxu0 0.0
    %930 = vmatpush1.msra.mxu0 0.0
    %931 = vmatprep.subr.mxu0 0.0
    %932 = vmatpush1.msra.mxu0 0.0
    %933 = vmatprep.subr.mxu0 0.0
    %934 = vmatpush1.msra.mxu0 0.0
    %935 = vmatprep.subr.mxu0 0.0
    %936 = vmatpush1.msra.mxu0 0.0
    %937 = vmatprep.subr.mxu0 0.0
    %938 = vmatpush1.msra.mxu0 0.0
    %939 = vmatprep.subr.mxu0 0.0
    %940 = vmatpush1.msra.mxu0 0.0
    %941 = vmatprep.subr.mxu0 0.0
    %942 = vmatpush1.msra.mxu0 0.0
    %943 = vmatprep.subr.mxu0 0.0
    %944 = vmatpush1.msra.mxu0 0.0
    %945 = vmatprep.subr.mxu0 0.0
    %946 = vmatpush1.msra.mxu0 0.0
    %947 = vmatprep.subr.mxu0 0.0
    %948 = vmatpush1.msra.mxu0 0.0
    %949 = vmatprep.subr.mxu0 0.0
    %950 = vmatpush1.msra.mxu0 0.0
    %951 = vmatprep.subr.mxu0 0.0
    %952 = vmatpush1.msra.mxu0 0.0
    %953 = vmatprep.subr.mxu0 %v888
    %954 = vmatpush1.msra.mxu0 %v891
    %955 = vmatprep.subr.mxu0 0.0
    %956 = vmatpush2.msra.mxu0 0.0
    %957 = vmatprep.subr.mxu0 0.0
    %958 = vmatpush2.msra.mxu0 0.0
    %959 = vmatprep.subr.mxu0 0.0
    %960 = vmatpush2.msra.mxu0 0.0
    %961 = vmatprep.subr.mxu0 0.0
    %962 = vmatpush2.msra.mxu0 0.0
    %963 = vmatprep.subr.mxu0 0.0
    %964 = vmatpush2.msra.mxu0 0.0
    %965 = vmatprep.subr.mxu0 0.0
    %966 = vmatpush2.msra.mxu0 0.0
    %967 = vmatprep.subr.mxu0 0.0
    %968 = vmatpush2.msra.mxu0 0.0
    %969 = vmatprep.subr.mxu0 0.0
    %970 = vmatpush2.msra.mxu0 0.0
    %971 = vmatprep.subr.mxu0 0.0
    %972 = vmatpush2.msra.mxu0 0.0
    %973 = vmatprep.subr.mxu0 0.0
    %974 = vmatpush2.msra.mxu0 0.0
    %975 = vmatprep.subr.mxu0 0.0
    %976 = vmatpush2.msra.mxu0 0.0
    %977 = vmatprep.subr.mxu0 0.0
    %978 = vmatpush2.msra.mxu0 0.0
    %979 = vmatprep.subr.mxu0 0.0
    %980 = vmatpush2.msra.mxu0 0.0
    %981 = vmatprep.subr.mxu0 0.0
    %982 = vmatpush2.msra.mxu0 0.0
    %983 = vmatprep.subr.mxu0 0.0
    %984 = vmatpush2.msra.mxu0 0.0
    %985 = vmatprep.subr.mxu0 0.0
    %986 = vmatpush2.msra.mxu0 0.0
    %987 = vmatprep.mubr.f32.mxu0 0.0
    %988 = vmatmul.mubr.f32.gmra.mxu0 %v921
    %v989 = vpop.f32.mrf.mxu0
    %v990 = vadd.f32 0.0, %v989
    %v991 = vpop.f32.mrf.mxu0
    %v992 = vadd.f32 0.0, %v991
    %993 = vdwg.mxu0
    %v995 = vsel %vm129, %v64, 0
    %997 = vmatprep.subr.mxu0 0.0
    %998 = vmatpush1.msra.mxu0 0.0
    %999 = vmatprep.subr.mxu0 0.0
    %1000 = vmatpush1.msra.mxu0 0.0
    %1001 = vmatprep.subr.mxu0 0.0
    %1002 = vmatpush1.msra.mxu0 0.0
    %1003 = vmatprep.subr.mxu0 0.0
    %1004 = vmatpush1.msra.mxu0 0.0
    %1005 = vmatprep.subr.mxu0 0.0
    %1006 = vmatpush1.msra.mxu0 0.0
    %1007 = vmatprep.subr.mxu0 0.0
    %1008 = vmatpush1.msra.mxu0 0.0
    %1009 = vmatprep.subr.mxu0 0.0
    %1010 = vmatpush1.msra.mxu0 0.0
    %1011 = vmatprep.subr.mxu0 0.0
    %1012 = vmatpush1.msra.mxu0 0.0
    %1013 = vmatprep.subr.mxu0 0.0
    %1014 = vmatpush1.msra.mxu0 0.0
    %1015 = vmatprep.subr.mxu0 0.0
    %1016 = vmatpush1.msra.mxu0 0.0
    %1017 = vmatprep.subr.mxu0 0.0
    %1018 = vmatpush1.msra.mxu0 0.0
    %1019 = vmatprep.subr.mxu0 0.0
    %1020 = vmatpush1.msra.mxu0 0.0
    %1021 = vmatprep.subr.mxu0 0.0
    %1022 = vmatpush1.msra.mxu0 0.0
    %1023 = vmatprep.subr.mxu0 0.0
    %1024 = vmatpush1.msra.mxu0 0.0
    %1025 = vmatprep.subr.mxu0 0.0
    %1026 = vmatpush1.msra.mxu0 0.0
    %1027 = vmatprep.subr.mxu0 %v917
    %1028 = vmatpush1.msra.mxu0 %v916
    %1029 = vmatprep.subr.mxu0 0.0
    %1030 = vmatpush2.msra.mxu0 0.0
    %1031 = vmatprep.subr.mxu0 0.0
    %1032 = vmatpush2.msra.mxu0 0.0
    %1033 = vmatprep.subr.mxu0 0.0
    %1034 = vmatpush2.msra.mxu0 0.0
    %1035 = vmatprep.subr.mxu0 0.0
    %1036 = vmatpush2.msra.mxu0 0.0
    %1037 = vmatprep.subr.mxu0 0.0
    %1038 = vmatpush2.msra.mxu0 0.0
    %1039 = vmatprep.subr.mxu0 0.0
    %1040 = vmatpush2.msra.mxu0 0.0
    %1041 = vmatprep.subr.mxu0 0.0
    %1042 = vmatpush2.msra.mxu0 0.0
    %1043 = vmatprep.subr.mxu0 0.0
    %1044 = vmatpush2.msra.mxu0 0.0
    %1045 = vmatprep.subr.mxu0 0.0
    %1046 = vmatpush2.msra.mxu0 0.0
    %1047 = vmatprep.subr.mxu0 0.0
    %1048 = vmatpush2.msra.mxu0 0.0
    %1049 = vmatprep.subr.mxu0 0.0
    %1050 = vmatpush2.msra.mxu0 0.0
    %1051 = vmatprep.subr.mxu0 0.0
    %1052 = vmatpush2.msra.mxu0 0.0
    %1053 = vmatprep.subr.mxu0 0.0
    %1054 = vmatpush2.msra.mxu0 0.0
    %1055 = vmatprep.subr.mxu0 0.0
    %1056 = vmatpush2.msra.mxu0 0.0
    %1057 = vmatprep.subr.mxu0 0.0
    %1058 = vmatpush2.msra.mxu0 0.0
    %1059 = vmatprep.subr.mxu0 0.0
    %1060 = vmatpush2.msra.mxu0 0.0
    %1061 = vmatprep.mubr.f32.mxu0 0.0
    %1062 = vmatmul.mubr.f32.gmra.mxu0 %v995
    %v1063 = vpop.f32.mrf.mxu0
    %v1064 = vadd.f32 %v990, %v1063
    %v1065 = vpop.f32.mrf.mxu0
    %v1066 = vadd.f32 %v992, %v1065
    %1067 = vdwg.mxu0
    %v1069 = vsel %vm129, %v66, 0
    %1071 = vmatprep.subr.mxu0 0.0
    %1072 = vmatpush1.msra.mxu0 0.0
    %1073 = vmatprep.subr.mxu0 0.0
    %1074 = vmatpush1.msra.mxu0 0.0
    %1075 = vmatprep.subr.mxu0 0.0
    %1076 = vmatpush1.msra.mxu0 0.0
    %1077 = vmatprep.subr.mxu0 0.0
    %1078 = vmatpush1.msra.mxu0 0.0
    %1079 = vmatprep.subr.mxu0 0.0
    %1080 = vmatpush1.msra.mxu0 0.0
    %1081 = vmatprep.subr.mxu0 0.0
    %1082 = vmatpush1.msra.mxu0 0.0
    %1083 = vmatprep.subr.mxu0 0.0
    %1084 = vmatpush1.msra.mxu0 0.0
    %1085 = vmatprep.subr.mxu0 0.0
    %1086 = vmatpush1.msra.mxu0 0.0
    %1087 = vmatprep.subr.mxu0 0.0
    %1088 = vmatpush1.msra.mxu0 0.0
    %1089 = vmatprep.subr.mxu0 0.0
    %1090 = vmatpush1.msra.mxu0 0.0
    %1091 = vmatprep.subr.mxu0 0.0
    %1092 = vmatpush1.msra.mxu0 0.0
    %1093 = vmatprep.subr.mxu0 0.0
    %1094 = vmatpush1.msra.mxu0 0.0
    %1095 = vmatprep.subr.mxu0 0.0
    %1096 = vmatpush1.msra.mxu0 0.0
    %1097 = vmatprep.subr.mxu0 0.0
    %1098 = vmatpush1.msra.mxu0 0.0
    %1099 = vmatprep.subr.mxu0 0.0
    %1100 = vmatpush1.msra.mxu0 0.0
    %1101 = vmatprep.subr.mxu0 %v919
    %1102 = vmatpush1.msra.mxu0 %v918
    %1103 = vmatprep.subr.mxu0 0.0
    %1104 = vmatpush2.msra.mxu0 0.0
    %1105 = vmatprep.subr.mxu0 0.0
    %1106 = vmatpush2.msra.mxu0 0.0
    %1107 = vmatprep.subr.mxu0 0.0
    %1108 = vmatpush2.msra.mxu0 0.0
    %1109 = vmatprep.subr.mxu0 0.0
    %1110 = vmatpush2.msra.mxu0 0.0
    %1111 = vmatprep.subr.mxu0 0.0
    %1112 = vmatpush2.msra.mxu0 0.0
    %1113 = vmatprep.subr.mxu0 0.0
    %1114 = vmatpush2.msra.mxu0 0.0
    %1115 = vmatprep.subr.mxu0 0.0
    %1116 = vmatpush2.msra.mxu0 0.0
    %1117 = vmatprep.subr.mxu0 0.0
    %1118 = vmatpush2.msra.mxu0 0.0
    %1119 = vmatprep.subr.mxu0 0.0
    %1120 = vmatpush2.msra.mxu0 0.0
    %1121 = vmatprep.subr.mxu0 0.0
    %1122 = vmatpush2.msra.mxu0 0.0
    %1123 = vmatprep.subr.mxu0 0.0
    %1124 = vmatpush2.msra.mxu0 0.0
    %1125 = vmatprep.subr.mxu0 0.0
    %1126 = vmatpush2.msra.mxu0 0.0
    %1127 = vmatprep.subr.mxu0 0.0
    %1128 = vmatpush2.msra.mxu0 0.0
    %1129 = vmatprep.subr.mxu0 0.0
    %1130 = vmatpush2.msra.mxu0 0.0
    %1131 = vmatprep.subr.mxu0 0.0
    %1132 = vmatpush2.msra.mxu0 0.0
    %1133 = vmatprep.subr.mxu0 0.0
    %1134 = vmatpush2.msra.mxu0 0.0
    %1135 = vmatprep.mubr.f32.mxu0 0.0
    %1136 = vmatmul.mubr.f32.gmra.mxu0 %v1069
    %v1137 = vpop.f32.mrf.mxu0
    %v1138 = vadd.f32 0.0, %v1137
    %v1139 = vpop.f32.mrf.mxu0
    %v1140 = vadd.f32 0.0, %v1139
    %1141 = vdwg.mxu0
    %v1142 = vadd.f32 %v1064, %v1138
    %v1143 = vadd.f32 %v1066, %v1140
    %1144 = vrot.lane.b32.xlu0 %v877, 1
    %v1145 = vpop.permute.xlu0 %1144
    %1146 = vrot.lane.b32.xlu0 %v878, 1
    %v1147 = vpop.permute.xlu0 %1146
    %v1148 = vsel %vm103, %v1145, %v1147
    %v1151 = vsel %vm103, %v877, %v1145
    %1152 = vrot.lane.b32.xlu0 %v877, 127
    %v1153 = vpop.permute.xlu0 %1152
    %1154 = vrot.lane.b32.xlu0 %v878, 127
    %v1155 = vpop.permute.xlu0 %1154
    %v1156 = vsel %vm112, %v1153, %v1155
    %v1159 = vsel %vm112, %v1155, %v878
    %v1160 = vsel %vm119, %v1156, %v1151
    %v1161 = vsel %vm120, %v1159, %v1148
    %v1162 = vsel %vm125, %v1151, %v1156
    %v1163 = vsel %vm126, %v1148, %v1159
    %v1165 = vsel %vm129, %v67, 0
    %1167 = vmatprep.subr.mxu0 0.0
    %1168 = vmatpush1.msra.mxu0 0.0
    %1169 = vmatprep.subr.mxu0 0.0
    %1170 = vmatpush1.msra.mxu0 0.0
    %1171 = vmatprep.subr.mxu0 0.0
    %1172 = vmatpush1.msra.mxu0 0.0
    %1173 = vmatprep.subr.mxu0 0.0
    %1174 = vmatpush1.msra.mxu0 0.0
    %1175 = vmatprep.subr.mxu0 0.0
    %1176 = vmatpush1.msra.mxu0 0.0
    %1177 = vmatprep.subr.mxu0 0.0
    %1178 = vmatpush1.msra.mxu0 0.0
    %1179 = vmatprep.subr.mxu0 0.0
    %1180 = vmatpush1.msra.mxu0 0.0
    %1181 = vmatprep.subr.mxu0 0.0
    %1182 = vmatpush1.msra.mxu0 0.0
    %1183 = vmatprep.subr.mxu0 0.0
    %1184 = vmatpush1.msra.mxu0 0.0
    %1185 = vmatprep.subr.mxu0 0.0
    %1186 = vmatpush1.msra.mxu0 0.0
    %1187 = vmatprep.subr.mxu0 0.0
    %1188 = vmatpush1.msra.mxu0 0.0
    %1189 = vmatprep.subr.mxu0 0.0
    %1190 = vmatpush1.msra.mxu0 0.0
    %1191 = vmatprep.subr.mxu0 0.0
    %1192 = vmatpush1.msra.mxu0 0.0
    %1193 = vmatprep.subr.mxu0 0.0
    %1194 = vmatpush1.msra.mxu0 0.0
    %1195 = vmatprep.subr.mxu0 0.0
    %1196 = vmatpush1.msra.mxu0 0.0
    %1197 = vmatprep.subr.mxu0 %v1161
    %1198 = vmatpush1.msra.mxu0 %v1160
    %1199 = vmatprep.subr.mxu0 0.0
    %1200 = vmatpush2.msra.mxu0 0.0
    %1201 = vmatprep.subr.mxu0 0.0
    %1202 = vmatpush2.msra.mxu0 0.0
    %1203 = vmatprep.subr.mxu0 0.0
    %1204 = vmatpush2.msra.mxu0 0.0
    %1205 = vmatprep.subr.mxu0 0.0
    %1206 = vmatpush2.msra.mxu0 0.0
    %1207 = vmatprep.subr.mxu0 0.0
    %1208 = vmatpush2.msra.mxu0 0.0
    %1209 = vmatprep.subr.mxu0 0.0
    %1210 = vmatpush2.msra.mxu0 0.0
    %1211 = vmatprep.subr.mxu0 0.0
    %1212 = vmatpush2.msra.mxu0 0.0
    %1213 = vmatprep.subr.mxu0 0.0
    %1214 = vmatpush2.msra.mxu0 0.0
    %1215 = vmatprep.subr.mxu0 0.0
    %1216 = vmatpush2.msra.mxu0 0.0
    %1217 = vmatprep.subr.mxu0 0.0
    %1218 = vmatpush2.msra.mxu0 0.0
    %1219 = vmatprep.subr.mxu0 0.0
    %1220 = vmatpush2.msra.mxu0 0.0
    %1221 = vmatprep.subr.mxu0 0.0
    %1222 = vmatpush2.msra.mxu0 0.0
    %1223 = vmatprep.subr.mxu0 0.0
    %1224 = vmatpush2.msra.mxu0 0.0
    %1225 = vmatprep.subr.mxu0 0.0
    %1226 = vmatpush2.msra.mxu0 0.0
    %1227 = vmatprep.subr.mxu0 0.0
    %1228 = vmatpush2.msra.mxu0 0.0
    %1229 = vmatprep.subr.mxu0 0.0
    %1230 = vmatpush2.msra.mxu0 0.0
    %1231 = vmatprep.mubr.f32.mxu0 0.0
    %1232 = vmatmul.mubr.f32.gmra.mxu0 %v1165
    %v1233 = vpop.f32.mrf.mxu0
    %v1234 = vadd.f32 0.0, %v1233
    %v1235 = vpop.f32.mrf.mxu0
    %v1236 = vadd.f32 0.0, %v1235
    %1237 = vdwg.mxu0
    %v1238 = vadd.f32 %v1142, %v1234
    %v1239 = vadd.f32 %v1143, %v1236
    %v1241 = vsel %vm129, %v68, 0
    %1243 = vmatprep.subr.mxu0 0.0
    %1244 = vmatpush1.msra.mxu0 0.0
    %1245 = vmatprep.subr.mxu0 0.0
    %1246 = vmatpush1.msra.mxu0 0.0
    %1247 = vmatprep.subr.mxu0 0.0
    %1248 = vmatpush1.msra.mxu0 0.0
    %1249 = vmatprep.subr.mxu0 0.0
    %1250 = vmatpush1.msra.mxu0 0.0
    %1251 = vmatprep.subr.mxu0 0.0
    %1252 = vmatpush1.msra.mxu0 0.0
    %1253 = vmatprep.subr.mxu0 0.0
    %1254 = vmatpush1.msra.mxu0 0.0
    %1255 = vmatprep.subr.mxu0 0.0
    %1256 = vmatpush1.msra.mxu0 0.0
    %1257 = vmatprep.subr.mxu0 0.0
    %1258 = vmatpush1.msra.mxu0 0.0
    %1259 = vmatprep.subr.mxu0 0.0
    %1260 = vmatpush1.msra.mxu0 0.0
    %1261 = vmatprep.subr.mxu0 0.0
    %1262 = vmatpush1.msra.mxu0 0.0
    %1263 = vmatprep.subr.mxu0 0.0
    %1264 = vmatpush1.msra.mxu0 0.0
    %1265 = vmatprep.subr.mxu0 0.0
    %1266 = vmatpush1.msra.mxu0 0.0
    %1267 = vmatprep.subr.mxu0 0.0
    %1268 = vmatpush1.msra.mxu0 0.0
    %1269 = vmatprep.subr.mxu0 0.0
    %1270 = vmatpush1.msra.mxu0 0.0
    %1271 = vmatprep.subr.mxu0 0.0
    %1272 = vmatpush1.msra.mxu0 0.0
    %1273 = vmatprep.subr.mxu0 %v878
    %1274 = vmatpush1.msra.mxu0 %v877
    %1275 = vmatprep.subr.mxu0 0.0
    %1276 = vmatpush2.msra.mxu0 0.0
    %1277 = vmatprep.subr.mxu0 0.0
    %1278 = vmatpush2.msra.mxu0 0.0
    %1279 = vmatprep.subr.mxu0 0.0
    %1280 = vmatpush2.msra.mxu0 0.0
    %1281 = vmatprep.subr.mxu0 0.0
    %1282 = vmatpush2.msra.mxu0 0.0
    %1283 = vmatprep.subr.mxu0 0.0
    %1284 = vmatpush2.msra.mxu0 0.0
    %1285 = vmatprep.subr.mxu0 0.0
    %1286 = vmatpush2.msra.mxu0 0.0
    %1287 = vmatprep.subr.mxu0 0.0
    %1288 = vmatpush2.msra.mxu0 0.0
    %1289 = vmatprep.subr.mxu0 0.0
    %1290 = vmatpush2.msra.mxu0 0.0
    %1291 = vmatprep.subr.mxu0 0.0
    %1292 = vmatpush2.msra.mxu0 0.0
    %1293 = vmatprep.subr.mxu0 0.0
    %1294 = vmatpush2.msra.mxu0 0.0
    %1295 = vmatprep.subr.mxu0 0.0
    %1296 = vmatpush2.msra.mxu0 0.0
    %1297 = vmatprep.subr.mxu0 0.0
    %1298 = vmatpush2.msra.mxu0 0.0
    %1299 = vmatprep.subr.mxu0 0.0
    %1300 = vmatpush2.msra.mxu0 0.0
    %1301 = vmatprep.subr.mxu0 0.0
    %1302 = vmatpush2.msra.mxu0 0.0
    %1303 = vmatprep.subr.mxu0 0.0
    %1304 = vmatpush2.msra.mxu0 0.0
    %1305 = vmatprep.subr.mxu0 0.0
    %1306 = vmatpush2.msra.mxu0 0.0
    %1307 = vmatprep.mubr.f32.mxu0 0.0
    %1308 = vmatmul.mubr.f32.gmra.mxu0 %v1241
    %v1309 = vpop.f32.mrf.mxu0
    %v1310 = vadd.f32 0.0, %v1309
    %v1311 = vpop.f32.mrf.mxu0
    %v1312 = vadd.f32 0.0, %v1311
    %1313 = vdwg.mxu0
    %v1314 = vadd.f32 %v1238, %v1310
    %v1315 = vadd.f32 %v1239, %v1312
    %v1317 = vsel %vm129, %v69, 0
    %1319 = vmatprep.subr.mxu0 0.0
    %1320 = vmatpush1.msra.mxu0 0.0
    %1321 = vmatprep.subr.mxu0 0.0
    %1322 = vmatpush1.msra.mxu0 0.0
    %1323 = vmatprep.subr.mxu0 0.0
    %1324 = vmatpush1.msra.mxu0 0.0
    %1325 = vmatprep.subr.mxu0 0.0
    %1326 = vmatpush1.msra.mxu0 0.0
    %1327 = vmatprep.subr.mxu0 0.0
    %1328 = vmatpush1.msra.mxu0 0.0
    %1329 = vmatprep.subr.mxu0 0.0
    %1330 = vmatpush1.msra.mxu0 0.0
    %1331 = vmatprep.subr.mxu0 0.0
    %1332 = vmatpush1.msra.mxu0 0.0
    %1333 = vmatprep.subr.mxu0 0.0
    %1334 = vmatpush1.msra.mxu0 0.0
    %1335 = vmatprep.subr.mxu0 0.0
    %1336 = vmatpush1.msra.mxu0 0.0
    %1337 = vmatprep.subr.mxu0 0.0
    %1338 = vmatpush1.msra.mxu0 0.0
    %1339 = vmatprep.subr.mxu0 0.0
    %1340 = vmatpush1.msra.mxu0 0.0
    %1341 = vmatprep.subr.mxu0 0.0
    %1342 = vmatpush1.msra.mxu0 0.0
    %1343 = vmatprep.subr.mxu0 0.0
    %1344 = vmatpush1.msra.mxu0 0.0
    %1345 = vmatprep.subr.mxu0 0.0
    %1346 = vmatpush1.msra.mxu0 0.0
    %1347 = vmatprep.subr.mxu0 0.0
    %1348 = vmatpush1.msra.mxu0 0.0
    %1349 = vmatprep.subr.mxu0 %v1163
    %1350 = vmatpush1.msra.mxu0 %v1162
    %1351 = vmatprep.subr.mxu0 0.0
    %1352 = vmatpush2.msra.mxu0 0.0
    %1353 = vmatprep.subr.mxu0 0.0
    %1354 = vmatpush2.msra.mxu0 0.0
    %1355 = vmatprep.subr.mxu0 0.0
    %1356 = vmatpush2.msra.mxu0 0.0
    %1357 = vmatprep.subr.mxu0 0.0
    %1358 = vmatpush2.msra.mxu0 0.0
    %1359 = vmatprep.subr.mxu0 0.0
    %1360 = vmatpush2.msra.mxu0 0.0
    %1361 = vmatprep.subr.mxu0 0.0
    %1362 = vmatpush2.msra.mxu0 0.0
    %1363 = vmatprep.subr.mxu0 0.0
    %1364 = vmatpush2.msra.mxu0 0.0
    %1365 = vmatprep.subr.mxu0 0.0
    %1366 = vmatpush2.msra.mxu0 0.0
    %1367 = vmatprep.subr.mxu0 0.0
    %1368 = vmatpush2.msra.mxu0 0.0
    %1369 = vmatprep.subr.mxu0 0.0
    %1370 = vmatpush2.msra.mxu0 0.0
    %1371 = vmatprep.subr.mxu0 0.0
    %1372 = vmatpush2.msra.mxu0 0.0
    %1373 = vmatprep.subr.mxu0 0.0
    %1374 = vmatpush2.msra.mxu0 0.0
    %1375 = vmatprep.subr.mxu0 0.0
    %1376 = vmatpush2.msra.mxu0 0.0
    %1377 = vmatprep.subr.mxu0 0.0
    %1378 = vmatpush2.msra.mxu0 0.0
    %1379 = vmatprep.subr.mxu0 0.0
    %1380 = vmatpush2.msra.mxu0 0.0
    %1381 = vmatprep.subr.mxu0 0.0
    %1382 = vmatpush2.msra.mxu0 0.0
    %1383 = vmatprep.mubr.f32.mxu0 0.0
    %1384 = vmatmul.mubr.f32.gmra.mxu0 %v1317
    %v1385 = vpop.f32.mrf.mxu0
    %v1386 = vadd.f32 0.0, %v1385
    %v1387 = vpop.f32.mrf.mxu0
    %v1388 = vadd.f32 0.0, %v1387
    %1389 = vdwg.mxu0
    %v1390 = vadd.f32 %v1314, %v1386
    %v1391 = vadd.f32 %v1315, %v1388
    %1393 = vrot.lane.b32.xlu0 %v894, 1
    %v1394 = vpop.permute.xlu0 %1393
    %1395 = vrot.lane.b32.xlu0 %v898, 1
    %v1396 = vpop.permute.xlu0 %1395
    %v1397 = vsel %vm103, %v1394, %v1396
    %v1400 = vsel %vm103, %v894, %v1394
    %1401 = vrot.lane.b32.xlu0 %v894, 127
    %v1402 = vpop.permute.xlu0 %1401
    %1403 = vrot.lane.b32.xlu0 %v898, 127
    %v1404 = vpop.permute.xlu0 %1403
    %v1405 = vsel %vm112, %v1402, %v1404
    %v1408 = vsel %vm112, %v1404, %v898
    %v1409 = vsel %vm119, %v1405, %v1400
    %v1410 = vsel %vm120, %v1408, %v1397
    %v1411 = vsel %vm125, %v1400, %v1405
    %v1412 = vsel %vm126, %v1397, %v1408
    %v1414 = vsel %vm129, %v70, 0
    %1416 = vmatprep.subr.mxu0 0.0
    %1417 = vmatpush1.msra.mxu0 0.0
    %1418 = vmatprep.subr.mxu0 0.0
    %1419 = vmatpush1.msra.mxu0 0.0
    %1420 = vmatprep.subr.mxu0 0.0
    %1421 = vmatpush1.msra.mxu0 0.0
    %1422 = vmatprep.subr.mxu0 0.0
    %1423 = vmatpush1.msra.mxu0 0.0
    %1424 = vmatprep.subr.mxu0 0.0
    %1425 = vmatpush1.msra.mxu0 0.0
    %1426 = vmatprep.subr.mxu0 0.0
    %1427 = vmatpush1.msra.mxu0 0.0
    %1428 = vmatprep.subr.mxu0 0.0
    %1429 = vmatpush1.msra.mxu0 0.0
    %1430 = vmatprep.subr.mxu0 0.0
    %1431 = vmatpush1.msra.mxu0 0.0
    %1432 = vmatprep.subr.mxu0 0.0
    %1433 = vmatpush1.msra.mxu0 0.0
    %1434 = vmatprep.subr.mxu0 0.0
    %1435 = vmatpush1.msra.mxu0 0.0
    %1436 = vmatprep.subr.mxu0 0.0
    %1437 = vmatpush1.msra.mxu0 0.0
    %1438 = vmatprep.subr.mxu0 0.0
    %1439 = vmatpush1.msra.mxu0 0.0
    %1440 = vmatprep.subr.mxu0 0.0
    %1441 = vmatpush1.msra.mxu0 0.0
    %1442 = vmatprep.subr.mxu0 0.0
    %1443 = vmatpush1.msra.mxu0 0.0
    %1444 = vmatprep.subr.mxu0 0.0
    %1445 = vmatpush1.msra.mxu0 0.0
    %1446 = vmatprep.subr.mxu0 %v1410
    %1447 = vmatpush1.msra.mxu0 %v1409
    %1448 = vmatprep.subr.mxu0 0.0
    %1449 = vmatpush2.msra.mxu0 0.0
    %1450 = vmatprep.subr.mxu0 0.0
    %1451 = vmatpush2.msra.mxu0 0.0
    %1452 = vmatprep.subr.mxu0 0.0
    %1453 = vmatpush2.msra.mxu0 0.0
    %1454 = vmatprep.subr.mxu0 0.0
    %1455 = vmatpush2.msra.mxu0 0.0
    %1456 = vmatprep.subr.mxu0 0.0
    %1457 = vmatpush2.msra.mxu0 0.0
    %1458 = vmatprep.subr.mxu0 0.0
    %1459 = vmatpush2.msra.mxu0 0.0
    %1460 = vmatprep.subr.mxu0 0.0
    %1461 = vmatpush2.msra.mxu0 0.0
    %1462 = vmatprep.subr.mxu0 0.0
    %1463 = vmatpush2.msra.mxu0 0.0
    %1464 = vmatprep.subr.mxu0 0.0
    %1465 = vmatpush2.msra.mxu0 0.0
    %1466 = vmatprep.subr.mxu0 0.0
    %1467 = vmatpush2.msra.mxu0 0.0
    %1468 = vmatprep.subr.mxu0 0.0
    %1469 = vmatpush2.msra.mxu0 0.0
    %1470 = vmatprep.subr.mxu0 0.0
    %1471 = vmatpush2.msra.mxu0 0.0
    %1472 = vmatprep.subr.mxu0 0.0
    %1473 = vmatpush2.msra.mxu0 0.0
    %1474 = vmatprep.subr.mxu0 0.0
    %1475 = vmatpush2.msra.mxu0 0.0
    %1476 = vmatprep.subr.mxu0 0.0
    %1477 = vmatpush2.msra.mxu0 0.0
    %1478 = vmatprep.subr.mxu0 0.0
    %1479 = vmatpush2.msra.mxu0 0.0
    %1480 = vmatprep.mubr.f32.mxu0 0.0
    %1481 = vmatmul.mubr.f32.gmra.mxu0 %v1414
    %v1482 = vpop.f32.mrf.mxu0
    %v1483 = vadd.f32 0.0, %v1482
    %v1484 = vpop.f32.mrf.mxu0
    %v1485 = vadd.f32 0.0, %v1484
    %1486 = vdwg.mxu0
    %v1487 = vadd.f32 %v1390, %v1483
    %v1488 = vadd.f32 %v1391, %v1485
    %v1490 = vsel %vm129, %v71, 0
    %1492 = vmatprep.subr.mxu0 0.0
    %1493 = vmatpush1.msra.mxu0 0.0
    %1494 = vmatprep.subr.mxu0 0.0
    %1495 = vmatpush1.msra.mxu0 0.0
    %1496 = vmatprep.subr.mxu0 0.0
    %1497 = vmatpush1.msra.mxu0 0.0
    %1498 = vmatprep.subr.mxu0 0.0
    %1499 = vmatpush1.msra.mxu0 0.0
    %1500 = vmatprep.subr.mxu0 0.0
    %1501 = vmatpush1.msra.mxu0 0.0
    %1502 = vmatprep.subr.mxu0 0.0
    %1503 = vmatpush1.msra.mxu0 0.0
    %1504 = vmatprep.subr.mxu0 0.0
    %1505 = vmatpush1.msra.mxu0 0.0
    %1506 = vmatprep.subr.mxu0 0.0
    %1507 = vmatpush1.msra.mxu0 0.0
    %1508 = vmatprep.subr.mxu0 0.0
    %1509 = vmatpush1.msra.mxu0 0.0
    %1510 = vmatprep.subr.mxu0 0.0
    %1511 = vmatpush1.msra.mxu0 0.0
    %1512 = vmatprep.subr.mxu0 0.0
    %1513 = vmatpush1.msra.mxu0 0.0
    %1514 = vmatprep.subr.mxu0 0.0
    %1515 = vmatpush1.msra.mxu0 0.0
    %1516 = vmatprep.subr.mxu0 0.0
    %1517 = vmatpush1.msra.mxu0 0.0
    %1518 = vmatprep.subr.mxu0 0.0
    %1519 = vmatpush1.msra.mxu0 0.0
    %1520 = vmatprep.subr.mxu0 0.0
    %1521 = vmatpush1.msra.mxu0 0.0
    %1522 = vmatprep.subr.mxu0 %v898
    %1523 = vmatpush1.msra.mxu0 %v894
    %1524 = vmatprep.subr.mxu0 0.0
    %1525 = vmatpush2.msra.mxu0 0.0
    %1526 = vmatprep.subr.mxu0 0.0
    %1527 = vmatpush2.msra.mxu0 0.0
    %1528 = vmatprep.subr.mxu0 0.0
    %1529 = vmatpush2.msra.mxu0 0.0
    %1530 = vmatprep.subr.mxu0 0.0
    %1531 = vmatpush2.msra.mxu0 0.0
    %1532 = vmatprep.subr.mxu0 0.0
    %1533 = vmatpush2.msra.mxu0 0.0
    %1534 = vmatprep.subr.mxu0 0.0
    %1535 = vmatpush2.msra.mxu0 0.0
    %1536 = vmatprep.subr.mxu0 0.0
    %1537 = vmatpush2.msra.mxu0 0.0
    %1538 = vmatprep.subr.mxu0 0.0
    %1539 = vmatpush2.msra.mxu0 0.0
    %1540 = vmatprep.subr.mxu0 0.0
    %1541 = vmatpush2.msra.mxu0 0.0
    %1542 = vmatprep.subr.mxu0 0.0
    %1543 = vmatpush2.msra.mxu0 0.0
    %1544 = vmatprep.subr.mxu0 0.0
    %1545 = vmatpush2.msra.mxu0 0.0
    %1546 = vmatprep.subr.mxu0 0.0
    %1547 = vmatpush2.msra.mxu0 0.0
    %1548 = vmatprep.subr.mxu0 0.0
    %1549 = vmatpush2.msra.mxu0 0.0
    %1550 = vmatprep.subr.mxu0 0.0
    %1551 = vmatpush2.msra.mxu0 0.0
    %1552 = vmatprep.subr.mxu0 0.0
    %1553 = vmatpush2.msra.mxu0 0.0
    %1554 = vmatprep.subr.mxu0 0.0
    %1555 = vmatpush2.msra.mxu0 0.0
    %1556 = vmatprep.mubr.f32.mxu0 0.0
    %1557 = vmatmul.mubr.f32.gmra.mxu0 %v1490
    %v1558 = vpop.f32.mrf.mxu0
    %v1559 = vadd.f32 0.0, %v1558
    %v1560 = vpop.f32.mrf.mxu0
    %v1561 = vadd.f32 0.0, %v1560
    %1562 = vdwg.mxu0
    %v1563 = vadd.f32 %v1487, %v1559
    %v1564 = vadd.f32 %v1488, %v1561
    %v1566 = vsel %vm129, %v72, 0
    %1568 = vmatprep.subr.mxu0 0.0
    %1569 = vmatpush1.msra.mxu0 0.0
    %1570 = vmatprep.subr.mxu0 0.0
    %1571 = vmatpush1.msra.mxu0 0.0
    %1572 = vmatprep.subr.mxu0 0.0
    %1573 = vmatpush1.msra.mxu0 0.0
    %1574 = vmatprep.subr.mxu0 0.0
    %1575 = vmatpush1.msra.mxu0 0.0
    %1576 = vmatprep.subr.mxu0 0.0
    %1577 = vmatpush1.msra.mxu0 0.0
    %1578 = vmatprep.subr.mxu0 0.0
    %1579 = vmatpush1.msra.mxu0 0.0
    %1580 = vmatprep.subr.mxu0 0.0
    %1581 = vmatpush1.msra.mxu0 0.0
    %1582 = vmatprep.subr.mxu0 0.0
    %1583 = vmatpush1.msra.mxu0 0.0
    %1584 = vmatprep.subr.mxu0 0.0
    %1585 = vmatpush1.msra.mxu0 0.0
    %1586 = vmatprep.subr.mxu0 0.0
    %1587 = vmatpush1.msra.mxu0 0.0
    %1588 = vmatprep.subr.mxu0 0.0
    %1589 = vmatpush1.msra.mxu0 0.0
    %1590 = vmatprep.subr.mxu0 0.0
    %1591 = vmatpush1.msra.mxu0 0.0
    %1592 = vmatprep.subr.mxu0 0.0
    %1593 = vmatpush1.msra.mxu0 0.0
    %1594 = vmatprep.subr.mxu0 0.0
    %1595 = vmatpush1.msra.mxu0 0.0
    %1596 = vmatprep.subr.mxu0 0.0
    %1597 = vmatpush1.msra.mxu0 0.0
    %1598 = vmatprep.subr.mxu0 %v1412
    %1599 = vmatpush1.msra.mxu0 %v1411
    %1600 = vmatprep.subr.mxu0 0.0
    %1601 = vmatpush2.msra.mxu0 0.0
    %1602 = vmatprep.subr.mxu0 0.0
    %1603 = vmatpush2.msra.mxu0 0.0
    %1604 = vmatprep.subr.mxu0 0.0
    %1605 = vmatpush2.msra.mxu0 0.0
    %1606 = vmatprep.subr.mxu0 0.0
    %1607 = vmatpush2.msra.mxu0 0.0
    %1608 = vmatprep.subr.mxu0 0.0
    %1609 = vmatpush2.msra.mxu0 0.0
    %1610 = vmatprep.subr.mxu0 0.0
    %1611 = vmatpush2.msra.mxu0 0.0
    %1612 = vmatprep.subr.mxu0 0.0
    %1613 = vmatpush2.msra.mxu0 0.0
    %1614 = vmatprep.subr.mxu0 0.0
    %1615 = vmatpush2.msra.mxu0 0.0
    %1616 = vmatprep.subr.mxu0 0.0
    %1617 = vmatpush2.msra.mxu0 0.0
    %1618 = vmatprep.subr.mxu0 0.0
    %1619 = vmatpush2.msra.mxu0 0.0
    %1620 = vmatprep.subr.mxu0 0.0
    %1621 = vmatpush2.msra.mxu0 0.0
    %1622 = vmatprep.subr.mxu0 0.0
    %1623 = vmatpush2.msra.mxu0 0.0
    %1624 = vmatprep.subr.mxu0 0.0
    %1625 = vmatpush2.msra.mxu0 0.0
    %1626 = vmatprep.subr.mxu0 0.0
    %1627 = vmatpush2.msra.mxu0 0.0
    %1628 = vmatprep.subr.mxu0 0.0
    %1629 = vmatpush2.msra.mxu0 0.0
    %1630 = vmatprep.subr.mxu0 0.0
    %1631 = vmatpush2.msra.mxu0 0.0
    %1632 = vmatprep.mubr.f32.mxu0 0.0
    %1633 = vmatmul.mubr.f32.gmra.mxu0 %v1566
    %v1634 = vpop.f32.mrf.mxu0
    %v1635 = vadd.f32 0.0, %v1634
    %v1636 = vpop.f32.mrf.mxu0
    %v1637 = vadd.f32 0.0, %v1636
    %1638 = vdwg.mxu0
    %v1639 = vadd.f32 %v1563, %v1635
    %v1640 = vadd.f32 %v1564, %v1637
    %1642 = vset.pattern.permute.xlu0 0
    %1643 = vperm.xlu0 %1642, %v73
    %v1644 = vpop.permute.xlu0 %1643
    %v1646 = vadd.f32 %v1639, %v1644
    %v1647 = vadd.f32 %v1640, %v1644
    %v1648 = vadd.f32 %v1646, %v1647
    %1649 = vadd.xlane.f32.xlu0 %v1648
    %v1650 = vpop.xlane.xlu0 %1649
    %v1651 = vmul.f32 %v1650, %v863
    %v1652 = vsub.f32 %v1646, %v1651
    %v1653 = vsub.f32 %v1647, %v1651
    %v1654 = vmul.f32 %v1652, %v1652
    %v1655 = vmul.f32 %v1653, %v1653
    %v1656 = vadd.f32 %v1654, %v1655
    %1657 = vadd.xlane.f32.xlu0 %v1656
    %v1658 = vpop.xlane.xlu0 %1657
    %v1659 = vmul.f32 %v1658, %v863
    %v1660 = vadd.f32 %v1659, 1e-05
    %v1661 = vrsqrt.pop %v1660
    %v1662 = vmul.f32 %v1652, %v1661
    %v1663 = vmul.f32 %v1653, %v1661
    %v1666 = vcombine.low %v1662, %v1663
    %v1667 = vcombine.high %v1662, %v1663
    %v1670 = vadd.f32 %v21, %v1666
    %v1671 = vadd.f32 %v22, %v1667
    %1672 = vst [vmem:[#allocation2] sm:$0xff] %v1670
    %1673 = vst [vmem:[#allocation2 + $0x8] sm:$0xff] %v1671
    // Predicated region
    $region22: #{tpu_custom_call.1} parent=1 // pred_check
      _
    $region23: #{tpu_custom_call.1} parent=1 // pred_check_branch
      %1675 = sbr.rel (0) target = $region25
    $region24: #{tpu_custom_call.1} parent=1 // pred_region
      %s1677 = ssub.s32 256, 256
      %1678 = vsyncadd [#allocation3], %s1677
      %s1679 = sshll.u32 [#allocation2], 4
      %s1680 = int_to_ptr.vmem [resolvable:$true] %s1679
      %1685 = dma.vmem_to_hbm [thread:$0]  %s1680, 256, %s5, [#allocation3], 128, 128, 8
    $region25: #{tpu_custom_call.1} parent=1 // pred_fallthru
      _
    // Predicated region
    $region26: #{tpu_custom_call.1} parent=1 // pred_check
      _
    $region27: #{tpu_custom_call.1} parent=1 // pred_check_branch
      %1687 = sbr.rel (0) target = $region29
    $region28: #{tpu_custom_call.1} parent=1 // pred_region
      %1688 = dma.done [#allocation3], 256
    $region29: #{tpu_custom_call.1} parent=1 // pred_fallthru
      _
    %1689 = vsyncpa [#allocation3], 1

</llo_original>
